<compile_context>
chip_gen: v5e
topology: v5e:2x2
jax: 0.10.0
libtpu: 0.0.40
codegen_flags: <defaults>
</compile_context>

<pallas_src>
import functools

import jax
import jax.numpy as jnp
from jax import lax
from jax.experimental import pallas as pl
from jax.experimental.pallas import tpu as pltpu

EPS = 1e-5  # InstanceNorm3d default eps


def _round_up(v, m):
    return ((v + m - 1) // m) * m


# ----------------------------- Pallas kernel --------------------------------
def _conv_block_kernel(x_ref, mask_ref, w1_ref, b1_ref, a1_ref,
                       w2_ref, b2_ref, a2_ref, o_ref, buf_ref,
                       *, offsets, ppl, margin, inv_count):
    # x_ref:    (1, Cin_p, L)      bf16  margin+lane-padded flat padded sample
    # mask_ref: (1, Ppl)           f32   1.0 at valid output positions
    # w*_ref:   (K, Cout_p, Cin_p) bf16  per-tap conv weights
    # b*_ref:   (Cout_p, 1)        f32   conv bias
    # a*_ref:   (1, 1)             f32   PReLU slope (SMEM scalar)
    # o_ref:    (1, Cout_p, Ppl)   f32
    # buf_ref:  (Cout_p, L)        bf16  VMEM scratch (stage-1 output, re-padded)
    mask = mask_ref[...]                                     # (1, Ppl)

    def conv_in_prelu(tap_fn, w_ref, b_ref, alpha, mask_output):
        # Shifted-tap conv: one small MXU matmul per tap, f32 accumulation.
        acc = None
        for t, off in enumerate(offsets):
            part = jnp.dot(w_ref[t], tap_fn(off),
                           preferred_element_type=jnp.float32)
            acc = part if acc is None else acc + part
        y = acc + b_ref[...]                                 # (Cout_p, Ppl) f32
        # one-pass masked InstanceNorm statistics over valid positions only
        ym = y * mask
        mean = jnp.sum(ym, axis=-1, keepdims=True) * inv_count
        ex2 = jnp.sum(ym * y, axis=-1, keepdims=True) * inv_count
        var = ex2 - mean * mean
        yn = (y - mean) * lax.rsqrt(var + EPS)
        yn = jnp.where(yn >= 0, yn, alpha * yn)              # PReLU
        return yn * mask if mask_output else yn

    # stage 1: conv + IN + PReLU, taps read straight from the input ref
    y1 = conv_in_prelu(lambda off: x_ref[0, :, off:off + ppl],
                       w1_ref, b1_ref, a1_ref[0, 0], mask_output=True)

    # stage-1 output -> margin-extended bf16 VMEM buffer; zeroed margin and
    # masked padding positions supply the zero padding of the fused 2nd conv.
    buf_ref[...] = jnp.zeros_like(buf_ref)
    buf_ref[:, margin:margin + ppl] = y1.astype(buf_ref.dtype)

    # stage 2: conv + IN + PReLU, taps read straight from the scratch ref
    y2 = conv_in_prelu(lambda off: buf_ref[:, off:off + ppl],
                       w2_ref, b2_ref, a2_ref[0, 0], mask_output=False)
    o_ref[0] = y2.astype(o_ref.dtype)


# ----------------------------- JAX wrapper -----------------------------------
def conv_block(x, params, ksize, padding):
    """convBlock: 2x (Conv3d stride=1 + InstanceNorm3d + PReLU), NCDHW layout,
    fused into a single Pallas kernel with one grid step per batch sample."""
    n, cin, d, h, w = x.shape
    kd, kh, kw = ksize
    pd, ph, pw = padding
    dp, hp, wp = d + 2 * pd, h + 2 * ph, w + 2 * pw
    pp = dp * hp * wp                       # flattened padded spatial size
    ppl = _round_up(pp, 128)                # lane-dense (128-multiple) width
    margin = pd * hp * wp + ph * wp + pw    # max |flat tap offset|
    ll = 2 * margin + ppl                   # margin-extended flat length
    cout = params["conv1"]["w"].shape[0]
    k = kd * kh * kw
    cin_p, cout_p = _round_up(cin, 8), _round_up(cout, 8)

    # static tap offsets into the margin-extended flat buffer
    offsets = tuple(margin + (a - pd) * hp * wp + (b - ph) * wp + (c - pw)
                    for a in range(kd) for b in range(kh) for c in range(kw))

    # (N,Cin,D,H,W) -> pad spatial -> flatten -> pad channels to x8 ->
    # add flat margin + lane tail -> bf16 MXU operand
    xp = jnp.pad(x, ((0, 0), (0, 0), (pd, pd), (ph, ph), (pw, pw)))
    xf = xp.reshape(n, cin, pp)
    xbuf = jnp.pad(xf, ((0, 0), (0, cin_p - cin),
                        (margin, margin + ppl - pp))).astype(jnp.bfloat16)

    # valid-output mask on the (lane-padded) flat padded grid
    valid = jnp.zeros((dp, hp, wp), jnp.float32)
    valid = valid.at[pd:pd + d, ph:ph + h, pw:pw + w].set(1.0)
    mask = jnp.pad(valid.reshape(1, pp), ((0, 0), (0, ppl - pp)))

    def fold_w(wt, ci_p, co_p):
        # (Cout, Cin, KD, KH, KW) -> (K, Cout_p, Cin_p) bf16
        co, ci = wt.shape[0], wt.shape[1]
        wk = jnp.transpose(wt, (2, 3, 4, 0, 1)).reshape(k, co, ci)
        wk = jnp.pad(wk, ((0, 0), (0, co_p - co), (0, ci_p - ci)))
        return wk.astype(jnp.bfloat16)

    def fold_b(bt, co_p):
        return jnp.pad(bt, (0, co_p - bt.shape[0])).reshape(co_p, 1).astype(jnp.float32)

    w1 = fold_w(params["conv1"]["w"], cin_p, cout_p)
    b1 = fold_b(params["conv1"]["b"], cout_p)
    a1 = jnp.asarray(params["conv1"]["alpha"], jnp.float32).reshape(1, 1)
    w2 = fold_w(params["conv2"]["w"], cout_p, cout_p)
    b2 = fold_b(params["conv2"]["b"], cout_p)
    a2 = jnp.asarray(params["conv2"]["alpha"], jnp.float32).reshape(1, 1)

    kernel = functools.partial(_conv_block_kernel, offsets=offsets, ppl=ppl,
                               margin=margin, inv_count=1.0 / (d * h * w))

    out = pl.pallas_call(
        kernel,
        out_shape=jax.ShapeDtypeStruct((n, cout_p, ppl), jnp.float32),
        grid=(n,),
        in_specs=[
            pl.BlockSpec((1, cin_p, ll), lambda i: (i, 0, 0)),        # x
            pl.BlockSpec((1, ppl), lambda i: (0, 0)),                 # mask
            pl.BlockSpec((k, cout_p, cin_p), lambda i: (0, 0, 0)),    # w1
            pl.BlockSpec((cout_p, 1), lambda i: (0, 0)),              # b1
            pl.BlockSpec(memory_space=pltpu.MemorySpace.SMEM),        # alpha1
            pl.BlockSpec((k, cout_p, cout_p), lambda i: (0, 0, 0)),   # w2
            pl.BlockSpec((cout_p, 1), lambda i: (0, 0)),              # b2
            pl.BlockSpec(memory_space=pltpu.MemorySpace.SMEM),        # alpha2
        ],
        out_specs=pl.BlockSpec((1, cout_p, ppl), lambda i: (i, 0, 0)),
        scratch_shapes=[pltpu.VMEM((cout_p, ll), jnp.bfloat16)],
        compiler_params=pltpu.CompilerParams(
            dimension_semantics=("parallel",),
            vmem_limit_bytes=32 * 1024 * 1024),   # safe on v5e/v6e/v7x
    )(xbuf, mask, w1, b1, a1, w2, b2, a2)

    out = out[:, :cout, :pp].reshape(n, cout, dp, hp, wp)
    return out[:, :, pd:pd + d, ph:ph + h, pw:pw + w]        # NCDHW


def bottleneck_forward(x, params, mode):
    if mode == "both":
        xc = jnp.concatenate(x, axis=1)                      # torch.cat(x, dim=1)
        o2d = conv_block(xc, params["conv2d"], (1, 3, 3), (0, 1, 1))
        o3d = conv_block(xc, params["conv3d"], (3, 3, 3), (1, 1, 1))
        return o2d, o3d
    elif mode == "2d":
        return conv_block(x, params["conv"], (1, 3, 3), (0, 1, 1))
    elif mode == "3d":
        return conv_block(x, params["conv"], (3, 3, 3), (1, 1, 1))
    raise ValueError(mode)


# ----------------------------- parameter init --------------------------------
def init_conv_params(key, cin, cout, ksize):
    k1, k2 = jax.random.split(key)
    fan_in = cin * ksize[0] * ksize[1] * ksize[2]
    bound = 1.0 / (fan_in ** 0.5)
    w = jax.random.uniform(k1, (cout, cin) + ksize, jnp.float32, -bound, bound)
    b = jax.random.uniform(k2, (cout,), jnp.float32, -bound, bound)
    return {"w": w, "b": b, "alpha": jnp.float32(0.25)}      # PReLU default 0.25


def init_convblock_params(key, cin, cout, ksize):
    k1, k2 = jax.random.split(key)
    return {"conv1": init_conv_params(k1, cin, cout, ksize),
            "conv2": init_conv_params(k2, cout, cout, ksize)}


# ----------------------------- pure-JAX reference ----------------------------
def _ref_conv_unit(x, w, b, alpha, padding):
    dn = lax.conv_dimension_numbers(x.shape, w.shape, ("NCDHW", "OIDHW", "NCDHW"))
    y = lax.conv_general_dilated(x, w, window_strides=(1, 1, 1),
                                 padding=[(p, p) for p in padding],
                                 dimension_numbers=dn,
                                 precision=lax.Precision.HIGHEST)
    y = y + b.reshape(1, -1, 1, 1, 1)
    mean = jnp.mean(y, axis=(2, 3, 4), keepdims=True)
    var = jnp.mean((y - mean) ** 2, axis=(2, 3, 4), keepdims=True)
    y = (y - mean) / jnp.sqrt(var + EPS)
    return jnp.where(y >= 0, y, alpha * y)


def _ref_conv_block(x, params, padding):
    x = _ref_conv_unit(x, params["conv1"]["w"], params["conv1"]["b"],
                       params["conv1"]["alpha"], padding)
    x = _ref_conv_unit(x, params["conv2"]["w"], params["conv2"]["b"],
                       params["conv2"]["alpha"], padding)
    return x


# ----------------------------------- main -------------------------------------
if __name__ == "__main__":
    key = jax.random.PRNGKey(0)
    k_x1, k_x2, k_p2d, k_p3d = jax.random.split(key, 4)

    # mode='both': forward receives a tuple, concatenated along channel dim 1.
    N, D, H, W = 2, 4, 8, 8
    in_channels, out_channels = 4, 8
    x0 = jax.random.normal(k_x1, (N, in_channels // 2, D, H, W), jnp.float32)
    x1 = jax.random.normal(k_x2, (N, in_channels // 2, D, H, W), jnp.float32)

    params = {
        "conv2d": init_convblock_params(k_p2d, in_channels, out_channels, (1, 3, 3)),
        "conv3d": init_convblock_params(k_p3d, in_channels, out_channels, (3, 3, 3)),
    }

    o2d, o3d = bottleneck_forward((x0, x1), params, mode="both")
    jax.block_until_ready((o2d, o3d))

    # Validate against a pure-JAX (f32 HIGHEST-precision) reference.
    xc = jnp.concatenate((x0, x1), axis=1)
    r2d = _ref_conv_block(xc, params["conv2d"], (0, 1, 1))
    r3d = _ref_conv_block(xc, params["conv3d"], (1, 1, 1))
    assert o2d.shape == (N, out_channels, D, H, W)
    assert o3d.shape == (N, out_channels, D, H, W)
    # Kernel intentionally uses bf16 MXU operands with f32 accumulation
    # (per perf guidance) -> slightly relaxed tolerance vs f32-HIGHEST ref.
    assert jnp.allclose(o2d, r2d, rtol=5e-2, atol=5e-2), float(jnp.max(jnp.abs(o2d - r2d)))
    assert jnp.allclose(o3d, r3d, rtol=5e-2, atol=5e-2), float(jnp.max(jnp.abs(o3d - r3d)))

    print("KERNEL_OK")
</pallas_src>

<mosaic_0001>
module attributes {stable_mosaic.version = 11 : i64} {
  func.func @_conv_block_kernel(%arg0: i32, %arg1: memref<1x8x534xbf16, #tpu.memory_space<vmem>>, %arg2: memref<1x512xf32, #tpu.memory_space<vmem>>, %arg3: memref<9x8x8xbf16, #tpu.memory_space<vmem>>, %arg4: memref<8x1xf32, #tpu.memory_space<vmem>>, %arg5: memref<1x1xf32, #tpu.memory_space<smem>>, %arg6: memref<9x8x8xbf16, #tpu.memory_space<vmem>>, %arg7: memref<8x1xf32, #tpu.memory_space<vmem>>, %arg8: memref<1x1xf32, #tpu.memory_space<smem>>, %arg9: memref<1x8x512xf32, #tpu.memory_space<vmem>>, %arg10: memref<8x534xbf16, #tpu.memory_space<vmem>>) attributes {dimension_semantics = [#tpu.dimension_semantics<parallel>], iteration_bounds = array<i64: 2>, scalar_prefetch = 0 : i64, scratch_operands = 1 : i64, tpu.core_type = #tpu.core_type<tc>, window_params = [{transform_indices = @transform_0, window_bounds = array<i64: 1, 8, 534>}, {pipeline_mode = #tpu.pipeline_mode<synchronous>, transform_indices = @transform_1, window_bounds = array<i64: 1, 512>}, {pipeline_mode = #tpu.pipeline_mode<synchronous>, transform_indices = @transform_2, window_bounds = array<i64: 9, 8, 8>}, {pipeline_mode = #tpu.pipeline_mode<synchronous>, transform_indices = @transform_3, window_bounds = array<i64: 8, 1>}, {transform_indices = @transform_4, window_bounds = array<i64: 1, 1>}, {pipeline_mode = #tpu.pipeline_mode<synchronous>, transform_indices = @transform_5, window_bounds = array<i64: 9, 8, 8>}, {pipeline_mode = #tpu.pipeline_mode<synchronous>, transform_indices = @transform_6, window_bounds = array<i64: 8, 1>}, {transform_indices = @transform_7, window_bounds = array<i64: 1, 1>}, {transform_indices = @transform_8, window_bounds = array<i64: 1, 8, 512>}]} {
    %c0 = arith.constant 0 : index
    %c0_0 = arith.constant 0 : index
    %0 = vector.load %arg2[%c0, %c0_0] : memref<1x512xf32, #tpu.memory_space<vmem>>, vector<1x512xf32>
    %c0_1 = arith.constant 0 : index
    %c0_2 = arith.constant 0 : index
    %1 = memref.load %arg5[%c0_1, %c0_2] : memref<1x1xf32, #tpu.memory_space<smem>>
    %c0_3 = arith.constant 0 : index
    %c0_4 = arith.constant 0 : index
    %c0_5 = arith.constant 0 : index
    %2 = vector.load %arg3[%c0_3, %c0_4, %c0_5] : memref<9x8x8xbf16, #tpu.memory_space<vmem>>, vector<1x8x8xbf16>
    %3 = vector.shape_cast %2 : vector<1x8x8xbf16> to vector<8x8xbf16>
    %c0_6 = arith.constant 0 : index
    %c0_7 = arith.constant 0 : index
    %c0_8 = arith.constant 0 : index
    %4 = vector.load %arg1[%c0_6, %c0_7, %c0_8] : memref<1x8x534xbf16, #tpu.memory_space<vmem>>, vector<1x8x512xbf16>
    %5 = vector.shape_cast %4 : vector<1x8x512xbf16> to vector<8x512xbf16>
    %cst = arith.constant dense<0.000000e+00> : vector<8x512xf32>
    %6 = tpu.matmul %3, %5, %cst {dimension_numbers = #tpu.dot_dimension_numbers<[1], [0], [0], [1], [0, 0, 1, 1], [], []>} : vector<8x8xbf16>, vector<8x512xbf16>, vector<8x512xf32> -> vector<8x512xf32>
    %c1 = arith.constant 1 : index
    %c0_9 = arith.constant 0 : index
    %c0_10 = arith.constant 0 : index
    %7 = vector.load %arg3[%c1, %c0_9, %c0_10] : memref<9x8x8xbf16, #tpu.memory_space<vmem>>, vector<1x8x8xbf16>
    %8 = vector.shape_cast %7 : vector<1x8x8xbf16> to vector<8x8xbf16>
    %c0_11 = arith.constant 0 : index
    %c0_12 = arith.constant 0 : index
    %c1_13 = arith.constant 1 : index
    %9 = vector.load %arg1[%c0_11, %c0_12, %c1_13] : memref<1x8x534xbf16, #tpu.memory_space<vmem>>, vector<1x8x512xbf16>
    %10 = vector.shape_cast %9 : vector<1x8x512xbf16> to vector<8x512xbf16>
    %cst_14 = arith.constant dense<0.000000e+00> : vector<8x512xf32>
    %11 = tpu.matmul %8, %10, %cst_14 {dimension_numbers = #tpu.dot_dimension_numbers<[1], [0], [0], [1], [0, 0, 1, 1], [], []>} : vector<8x8xbf16>, vector<8x512xbf16>, vector<8x512xf32> -> vector<8x512xf32>
    %12 = arith.addf %6, %11 : vector<8x512xf32>
    %c2 = arith.constant 2 : index
    %c0_15 = arith.constant 0 : index
    %c0_16 = arith.constant 0 : index
    %13 = vector.load %arg3[%c2, %c0_15, %c0_16] : memref<9x8x8xbf16, #tpu.memory_space<vmem>>, vector<1x8x8xbf16>
    %14 = vector.shape_cast %13 : vector<1x8x8xbf16> to vector<8x8xbf16>
    %c0_17 = arith.constant 0 : index
    %c0_18 = arith.constant 0 : index
    %c2_19 = arith.constant 2 : index
    %15 = vector.load %arg1[%c0_17, %c0_18, %c2_19] : memref<1x8x534xbf16, #tpu.memory_space<vmem>>, vector<1x8x512xbf16>
    %16 = vector.shape_cast %15 : vector<1x8x512xbf16> to vector<8x512xbf16>
    %cst_20 = arith.constant dense<0.000000e+00> : vector<8x512xf32>
    %17 = tpu.matmul %14, %16, %cst_20 {dimension_numbers = #tpu.dot_dimension_numbers<[1], [0], [0], [1], [0, 0, 1, 1], [], []>} : vector<8x8xbf16>, vector<8x512xbf16>, vector<8x512xf32> -> vector<8x512xf32>
    %18 = arith.addf %12, %17 : vector<8x512xf32>
    %c3 = arith.constant 3 : index
    %c0_21 = arith.constant 0 : index
    %c0_22 = arith.constant 0 : index
    %19 = vector.load %arg3[%c3, %c0_21, %c0_22] : memref<9x8x8xbf16, #tpu.memory_space<vmem>>, vector<1x8x8xbf16>
    %20 = vector.shape_cast %19 : vector<1x8x8xbf16> to vector<8x8xbf16>
    %c0_23 = arith.constant 0 : index
    %c0_24 = arith.constant 0 : index
    %c10 = arith.constant 10 : index
    %21 = vector.load %arg1[%c0_23, %c0_24, %c10] : memref<1x8x534xbf16, #tpu.memory_space<vmem>>, vector<1x8x512xbf16>
    %22 = vector.shape_cast %21 : vector<1x8x512xbf16> to vector<8x512xbf16>
    %cst_25 = arith.constant dense<0.000000e+00> : vector<8x512xf32>
    %23 = tpu.matmul %20, %22, %cst_25 {dimension_numbers = #tpu.dot_dimension_numbers<[1], [0], [0], [1], [0, 0, 1, 1], [], []>} : vector<8x8xbf16>, vector<8x512xbf16>, vector<8x512xf32> -> vector<8x512xf32>
    %24 = arith.addf %18, %23 : vector<8x512xf32>
    %c4 = arith.constant 4 : index
    %c0_26 = arith.constant 0 : index
    %c0_27 = arith.constant 0 : index
    %25 = vector.load %arg3[%c4, %c0_26, %c0_27] : memref<9x8x8xbf16, #tpu.memory_space<vmem>>, vector<1x8x8xbf16>
    %26 = vector.shape_cast %25 : vector<1x8x8xbf16> to vector<8x8xbf16>
    %c0_28 = arith.constant 0 : index
    %c0_29 = arith.constant 0 : index
    %c11 = arith.constant 11 : index
    %27 = vector.load %arg1[%c0_28, %c0_29, %c11] : memref<1x8x534xbf16, #tpu.memory_space<vmem>>, vector<1x8x512xbf16>
    %28 = vector.shape_cast %27 : vector<1x8x512xbf16> to vector<8x512xbf16>
    %cst_30 = arith.constant dense<0.000000e+00> : vector<8x512xf32>
    %29 = tpu.matmul %26, %28, %cst_30 {dimension_numbers = #tpu.dot_dimension_numbers<[1], [0], [0], [1], [0, 0, 1, 1], [], []>} : vector<8x8xbf16>, vector<8x512xbf16>, vector<8x512xf32> -> vector<8x512xf32>
    %30 = arith.addf %24, %29 : vector<8x512xf32>
    %c5 = arith.constant 5 : index
    %c0_31 = arith.constant 0 : index
    %c0_32 = arith.constant 0 : index
    %31 = vector.load %arg3[%c5, %c0_31, %c0_32] : memref<9x8x8xbf16, #tpu.memory_space<vmem>>, vector<1x8x8xbf16>
    %32 = vector.shape_cast %31 : vector<1x8x8xbf16> to vector<8x8xbf16>
    %c0_33 = arith.constant 0 : index
    %c0_34 = arith.constant 0 : index
    %c12 = arith.constant 12 : index
    %33 = vector.load %arg1[%c0_33, %c0_34, %c12] : memref<1x8x534xbf16, #tpu.memory_space<vmem>>, vector<1x8x512xbf16>
    %34 = vector.shape_cast %33 : vector<1x8x512xbf16> to vector<8x512xbf16>
    %cst_35 = arith.constant dense<0.000000e+00> : vector<8x512xf32>
    %35 = tpu.matmul %32, %34, %cst_35 {dimension_numbers = #tpu.dot_dimension_numbers<[1], [0], [0], [1], [0, 0, 1, 1], [], []>} : vector<8x8xbf16>, vector<8x512xbf16>, vector<8x512xf32> -> vector<8x512xf32>
    %36 = arith.addf %30, %35 : vector<8x512xf32>
    %c6 = arith.constant 6 : index
    %c0_36 = arith.constant 0 : index
    %c0_37 = arith.constant 0 : index
    %37 = vector.load %arg3[%c6, %c0_36, %c0_37] : memref<9x8x8xbf16, #tpu.memory_space<vmem>>, vector<1x8x8xbf16>
    %38 = vector.shape_cast %37 : vector<1x8x8xbf16> to vector<8x8xbf16>
    %c0_38 = arith.constant 0 : index
    %c0_39 = arith.constant 0 : index
    %c20 = arith.constant 20 : index
    %39 = vector.load %arg1[%c0_38, %c0_39, %c20] : memref<1x8x534xbf16, #tpu.memory_space<vmem>>, vector<1x8x512xbf16>
    %40 = vector.shape_cast %39 : vector<1x8x512xbf16> to vector<8x512xbf16>
    %cst_40 = arith.constant dense<0.000000e+00> : vector<8x512xf32>
    %41 = tpu.matmul %38, %40, %cst_40 {dimension_numbers = #tpu.dot_dimension_numbers<[1], [0], [0], [1], [0, 0, 1, 1], [], []>} : vector<8x8xbf16>, vector<8x512xbf16>, vector<8x512xf32> -> vector<8x512xf32>
    %42 = arith.addf %36, %41 : vector<8x512xf32>
    %c7 = arith.constant 7 : index
    %c0_41 = arith.constant 0 : index
    %c0_42 = arith.constant 0 : index
    %43 = vector.load %arg3[%c7, %c0_41, %c0_42] : memref<9x8x8xbf16, #tpu.memory_space<vmem>>, vector<1x8x8xbf16>
    %44 = vector.shape_cast %43 : vector<1x8x8xbf16> to vector<8x8xbf16>
    %c0_43 = arith.constant 0 : index
    %c0_44 = arith.constant 0 : index
    %c21 = arith.constant 21 : index
    %45 = vector.load %arg1[%c0_43, %c0_44, %c21] : memref<1x8x534xbf16, #tpu.memory_space<vmem>>, vector<1x8x512xbf16>
    %46 = vector.shape_cast %45 : vector<1x8x512xbf16> to vector<8x512xbf16>
    %cst_45 = arith.constant dense<0.000000e+00> : vector<8x512xf32>
    %47 = tpu.matmul %44, %46, %cst_45 {dimension_numbers = #tpu.dot_dimension_numbers<[1], [0], [0], [1], [0, 0, 1, 1], [], []>} : vector<8x8xbf16>, vector<8x512xbf16>, vector<8x512xf32> -> vector<8x512xf32>
    %48 = arith.addf %42, %47 : vector<8x512xf32>
    %c8 = arith.constant 8 : index
    %c0_46 = arith.constant 0 : index
    %c0_47 = arith.constant 0 : index
    %49 = vector.load %arg3[%c8, %c0_46, %c0_47] : memref<9x8x8xbf16, #tpu.memory_space<vmem>>, vector<1x8x8xbf16>
    %50 = vector.shape_cast %49 : vector<1x8x8xbf16> to vector<8x8xbf16>
    %c0_48 = arith.constant 0 : index
    %c0_49 = arith.constant 0 : index
    %c22 = arith.constant 22 : index
    %51 = vector.load %arg1[%c0_48, %c0_49, %c22] : memref<1x8x534xbf16, #tpu.memory_space<vmem>>, vector<1x8x512xbf16>
    %52 = vector.shape_cast %51 : vector<1x8x512xbf16> to vector<8x512xbf16>
    %cst_50 = arith.constant dense<0.000000e+00> : vector<8x512xf32>
    %53 = tpu.matmul %50, %52, %cst_50 {dimension_numbers = #tpu.dot_dimension_numbers<[1], [0], [0], [1], [0, 0, 1, 1], [], []>} : vector<8x8xbf16>, vector<8x512xbf16>, vector<8x512xf32> -> vector<8x512xf32>
    %54 = arith.addf %48, %53 : vector<8x512xf32>
    %c0_51 = arith.constant 0 : index
    %c0_52 = arith.constant 0 : index
    %55 = vector.load %arg4[%c0_51, %c0_52] : memref<8x1xf32, #tpu.memory_space<vmem>>, vector<8x1xf32>
    %56 = vector.broadcast %55 : vector<8x1xf32> to vector<8x512xf32>
    %57 = arith.addf %54, %56 : vector<8x512xf32>
    %58 = vector.broadcast %0 : vector<1x512xf32> to vector<8x512xf32>
    %59 = arith.mulf %57, %58 : vector<8x512xf32>
    %cst_53 = arith.constant dense<0.000000e+00> : vector<8xf32>
    %60 = vector.multi_reduction <add>, %59, %cst_53 [1] : vector<8x512xf32> to vector<8xf32>
    %61 = vector.shape_cast %60 : vector<8xf32> to vector<8x1xf32>
    %cst_54 = arith.constant 3.906250e-03 : f32
    %62 = vector.broadcast %cst_54 : f32 to vector<8x1xf32>
    %63 = arith.mulf %61, %62 : vector<8x1xf32>
    %64 = arith.mulf %59, %57 : vector<8x512xf32>
    %cst_55 = arith.constant dense<0.000000e+00> : vector<8xf32>
    %65 = vector.multi_reduction <add>, %64, %cst_55 [1] : vector<8x512xf32> to vector<8xf32>
    %66 = vector.shape_cast %65 : vector<8xf32> to vector<8x1xf32>
    %cst_56 = arith.constant 3.906250e-03 : f32
    %67 = vector.broadcast %cst_56 : f32 to vector<8x1xf32>
    %68 = arith.mulf %66, %67 : vector<8x1xf32>
    %69 = arith.mulf %63, %63 : vector<8x1xf32>
    %70 = arith.subf %68, %69 : vector<8x1xf32>
    %71 = vector.broadcast %63 : vector<8x1xf32> to vector<8x512xf32>
    %72 = arith.subf %57, %71 : vector<8x512xf32>
    %cst_57 = arith.constant 9.99999974E-6 : f32
    %73 = vector.broadcast %cst_57 : f32 to vector<8x1xf32>
    %74 = arith.addf %70, %73 : vector<8x1xf32>
    %75 = math.rsqrt %74 : vector<8x1xf32>
    %76 = vector.broadcast %75 : vector<8x1xf32> to vector<8x512xf32>
    %77 = arith.mulf %72, %76 : vector<8x512xf32>
    %cst_58 = arith.constant 0.000000e+00 : f32
    %78 = vector.broadcast %cst_58 : f32 to vector<8x512xf32>
    %79 = arith.cmpf oge, %77, %78 : vector<8x512xf32>
    %80 = vector.broadcast %1 : f32 to vector<8x512xf32>
    %81 = arith.mulf %80, %77 : vector<8x512xf32>
    %82 = arith.select %79, %77, %81 : vector<8x512xi1>, vector<8x512xf32>
    %83 = vector.broadcast %0 : vector<1x512xf32> to vector<8x512xf32>
    %84 = arith.mulf %82, %83 : vector<8x512xf32>
    %cst_59 = arith.constant 0.000000e+00 : bf16
    %85 = vector.broadcast %cst_59 : bf16 to vector<8x534xbf16>
    %c0_60 = arith.constant 0 : index
    %c0_61 = arith.constant 0 : index
    %86 = vector.load %arg10[%c0_60, %c0_61] : memref<8x534xbf16, #tpu.memory_space<vmem>>, vector<8x534xbf16>
    tpu.vector_store %arg10[%c0_60, %c0_61], %85 {strides = array<i32>} : memref<8x534xbf16, #tpu.memory_space<vmem>>, vector<8x534xbf16>,
    %87 = arith.truncf %84 : vector<8x512xf32> to vector<8x512xbf16>
    %c0_62 = arith.constant 0 : index
    %c11_63 = arith.constant 11 : index
    %88 = vector.load %arg10[%c0_62, %c11_63] : memref<8x534xbf16, #tpu.memory_space<vmem>>, vector<8x512xbf16>
    tpu.vector_store %arg10[%c0_62, %c11_63], %87 {strides = array<i32>} : memref<8x534xbf16, #tpu.memory_space<vmem>>, vector<8x512xbf16>,
    %c0_64 = arith.constant 0 : index
    %c0_65 = arith.constant 0 : index
    %89 = memref.load %arg8[%c0_64, %c0_65] : memref<1x1xf32, #tpu.memory_space<smem>>
    %c0_66 = arith.constant 0 : index
    %c0_67 = arith.constant 0 : index
    %c0_68 = arith.constant 0 : index
    %90 = vector.load %arg6[%c0_66, %c0_67, %c0_68] : memref<9x8x8xbf16, #tpu.memory_space<vmem>>, vector<1x8x8xbf16>
    %91 = vector.shape_cast %90 : vector<1x8x8xbf16> to vector<8x8xbf16>
    %c0_69 = arith.constant 0 : index
    %c0_70 = arith.constant 0 : index
    %92 = vector.load %arg10[%c0_69, %c0_70] : memref<8x534xbf16, #tpu.memory_space<vmem>>, vector<8x512xbf16>
    %cst_71 = arith.constant dense<0.000000e+00> : vector<8x512xf32>
    %93 = tpu.matmul %91, %92, %cst_71 {dimension_numbers = #tpu.dot_dimension_numbers<[1], [0], [0], [1], [0, 0, 1, 1], [], []>} : vector<8x8xbf16>, vector<8x512xbf16>, vector<8x512xf32> -> vector<8x512xf32>
    %c1_72 = arith.constant 1 : index
    %c0_73 = arith.constant 0 : index
    %c0_74 = arith.constant 0 : index
    %94 = vector.load %arg6[%c1_72, %c0_73, %c0_74] : memref<9x8x8xbf16, #tpu.memory_space<vmem>>, vector<1x8x8xbf16>
    %95 = vector.shape_cast %94 : vector<1x8x8xbf16> to vector<8x8xbf16>
    %c0_75 = arith.constant 0 : index
    %c1_76 = arith.constant 1 : index
    %96 = vector.load %arg10[%c0_75, %c1_76] : memref<8x534xbf16, #tpu.memory_space<vmem>>, vector<8x512xbf16>
    %cst_77 = arith.constant dense<0.000000e+00> : vector<8x512xf32>
    %97 = tpu.matmul %95, %96, %cst_77 {dimension_numbers = #tpu.dot_dimension_numbers<[1], [0], [0], [1], [0, 0, 1, 1], [], []>} : vector<8x8xbf16>, vector<8x512xbf16>, vector<8x512xf32> -> vector<8x512xf32>
    %98 = arith.addf %93, %97 : vector<8x512xf32>
    %c2_78 = arith.constant 2 : index
    %c0_79 = arith.constant 0 : index
    %c0_80 = arith.constant 0 : index
    %99 = vector.load %arg6[%c2_78, %c0_79, %c0_80] : memref<9x8x8xbf16, #tpu.memory_space<vmem>>, vector<1x8x8xbf16>
    %100 = vector.shape_cast %99 : vector<1x8x8xbf16> to vector<8x8xbf16>
    %c0_81 = arith.constant 0 : index
    %c2_82 = arith.constant 2 : index
    %101 = vector.load %arg10[%c0_81, %c2_82] : memref<8x534xbf16, #tpu.memory_space<vmem>>, vector<8x512xbf16>
    %cst_83 = arith.constant dense<0.000000e+00> : vector<8x512xf32>
    %102 = tpu.matmul %100, %101, %cst_83 {dimension_numbers = #tpu.dot_dimension_numbers<[1], [0], [0], [1], [0, 0, 1, 1], [], []>} : vector<8x8xbf16>, vector<8x512xbf16>, vector<8x512xf32> -> vector<8x512xf32>
    %103 = arith.addf %98, %102 : vector<8x512xf32>
    %c3_84 = arith.constant 3 : index
    %c0_85 = arith.constant 0 : index
    %c0_86 = arith.constant 0 : index
    %104 = vector.load %arg6[%c3_84, %c0_85, %c0_86] : memref<9x8x8xbf16, #tpu.memory_space<vmem>>, vector<1x8x8xbf16>
    %105 = vector.shape_cast %104 : vector<1x8x8xbf16> to vector<8x8xbf16>
    %c0_87 = arith.constant 0 : index
    %c10_88 = arith.constant 10 : index
    %106 = vector.load %arg10[%c0_87, %c10_88] : memref<8x534xbf16, #tpu.memory_space<vmem>>, vector<8x512xbf16>
    %cst_89 = arith.constant dense<0.000000e+00> : vector<8x512xf32>
    %107 = tpu.matmul %105, %106, %cst_89 {dimension_numbers = #tpu.dot_dimension_numbers<[1], [0], [0], [1], [0, 0, 1, 1], [], []>} : vector<8x8xbf16>, vector<8x512xbf16>, vector<8x512xf32> -> vector<8x512xf32>
    %108 = arith.addf %103, %107 : vector<8x512xf32>
    %c4_90 = arith.constant 4 : index
    %c0_91 = arith.constant 0 : index
    %c0_92 = arith.constant 0 : index
    %109 = vector.load %arg6[%c4_90, %c0_91, %c0_92] : memref<9x8x8xbf16, #tpu.memory_space<vmem>>, vector<1x8x8xbf16>
    %110 = vector.shape_cast %109 : vector<1x8x8xbf16> to vector<8x8xbf16>
    %c0_93 = arith.constant 0 : index
    %c11_94 = arith.constant 11 : index
    %111 = vector.load %arg10[%c0_93, %c11_94] : memref<8x534xbf16, #tpu.memory_space<vmem>>, vector<8x512xbf16>
    %cst_95 = arith.constant dense<0.000000e+00> : vector<8x512xf32>
    %112 = tpu.matmul %110, %111, %cst_95 {dimension_numbers = #tpu.dot_dimension_numbers<[1], [0], [0], [1], [0, 0, 1, 1], [], []>} : vector<8x8xbf16>, vector<8x512xbf16>, vector<8x512xf32> -> vector<8x512xf32>
    %113 = arith.addf %108, %112 : vector<8x512xf32>
    %c5_96 = arith.constant 5 : index
    %c0_97 = arith.constant 0 : index
    %c0_98 = arith.constant 0 : index
    %114 = vector.load %arg6[%c5_96, %c0_97, %c0_98] : memref<9x8x8xbf16, #tpu.memory_space<vmem>>, vector<1x8x8xbf16>
    %115 = vector.shape_cast %114 : vector<1x8x8xbf16> to vector<8x8xbf16>
    %c0_99 = arith.constant 0 : index
    %c12_100 = arith.constant 12 : index
    %116 = vector.load %arg10[%c0_99, %c12_100] : memref<8x534xbf16, #tpu.memory_space<vmem>>, vector<8x512xbf16>
    %cst_101 = arith.constant dense<0.000000e+00> : vector<8x512xf32>
    %117 = tpu.matmul %115, %116, %cst_101 {dimension_numbers = #tpu.dot_dimension_numbers<[1], [0], [0], [1], [0, 0, 1, 1], [], []>} : vector<8x8xbf16>, vector<8x512xbf16>, vector<8x512xf32> -> vector<8x512xf32>
    %118 = arith.addf %113, %117 : vector<8x512xf32>
    %c6_102 = arith.constant 6 : index
    %c0_103 = arith.constant 0 : index
    %c0_104 = arith.constant 0 : index
    %119 = vector.load %arg6[%c6_102, %c0_103, %c0_104] : memref<9x8x8xbf16, #tpu.memory_space<vmem>>, vector<1x8x8xbf16>
    %120 = vector.shape_cast %119 : vector<1x8x8xbf16> to vector<8x8xbf16>
    %c0_105 = arith.constant 0 : index
    %c20_106 = arith.constant 20 : index
    %121 = vector.load %arg10[%c0_105, %c20_106] : memref<8x534xbf16, #tpu.memory_space<vmem>>, vector<8x512xbf16>
    %cst_107 = arith.constant dense<0.000000e+00> : vector<8x512xf32>
    %122 = tpu.matmul %120, %121, %cst_107 {dimension_numbers = #tpu.dot_dimension_numbers<[1], [0], [0], [1], [0, 0, 1, 1], [], []>} : vector<8x8xbf16>, vector<8x512xbf16>, vector<8x512xf32> -> vector<8x512xf32>
    %123 = arith.addf %118, %122 : vector<8x512xf32>
    %c7_108 = arith.constant 7 : index
    %c0_109 = arith.constant 0 : index
    %c0_110 = arith.constant 0 : index
    %124 = vector.load %arg6[%c7_108, %c0_109, %c0_110] : memref<9x8x8xbf16, #tpu.memory_space<vmem>>, vector<1x8x8xbf16>
    %125 = vector.shape_cast %124 : vector<1x8x8xbf16> to vector<8x8xbf16>
    %c0_111 = arith.constant 0 : index
    %c21_112 = arith.constant 21 : index
    %126 = vector.load %arg10[%c0_111, %c21_112] : memref<8x534xbf16, #tpu.memory_space<vmem>>, vector<8x512xbf16>
    %cst_113 = arith.constant dense<0.000000e+00> : vector<8x512xf32>
    %127 = tpu.matmul %125, %126, %cst_113 {dimension_numbers = #tpu.dot_dimension_numbers<[1], [0], [0], [1], [0, 0, 1, 1], [], []>} : vector<8x8xbf16>, vector<8x512xbf16>, vector<8x512xf32> -> vector<8x512xf32>
    %128 = arith.addf %123, %127 : vector<8x512xf32>
    %c8_114 = arith.constant 8 : index
    %c0_115 = arith.constant 0 : index
    %c0_116 = arith.constant 0 : index
    %129 = vector.load %arg6[%c8_114, %c0_115, %c0_116] : memref<9x8x8xbf16, #tpu.memory_space<vmem>>, vector<1x8x8xbf16>
    %130 = vector.shape_cast %129 : vector<1x8x8xbf16> to vector<8x8xbf16>
    %c0_117 = arith.constant 0 : index
    %c22_118 = arith.constant 22 : index
    %131 = vector.load %arg10[%c0_117, %c22_118] : memref<8x534xbf16, #tpu.memory_space<vmem>>, vector<8x512xbf16>
    %cst_119 = arith.constant dense<0.000000e+00> : vector<8x512xf32>
    %132 = tpu.matmul %130, %131, %cst_119 {dimension_numbers = #tpu.dot_dimension_numbers<[1], [0], [0], [1], [0, 0, 1, 1], [], []>} : vector<8x8xbf16>, vector<8x512xbf16>, vector<8x512xf32> -> vector<8x512xf32>
    %133 = arith.addf %128, %132 : vector<8x512xf32>
    %c0_120 = arith.constant 0 : index
    %c0_121 = arith.constant 0 : index
    %134 = vector.load %arg7[%c0_120, %c0_121] : memref<8x1xf32, #tpu.memory_space<vmem>>, vector<8x1xf32>
    %135 = vector.broadcast %134 : vector<8x1xf32> to vector<8x512xf32>
    %136 = arith.addf %133, %135 : vector<8x512xf32>
    %137 = vector.broadcast %0 : vector<1x512xf32> to vector<8x512xf32>
    %138 = arith.mulf %136, %137 : vector<8x512xf32>
    %cst_122 = arith.constant dense<0.000000e+00> : vector<8xf32>
    %139 = vector.multi_reduction <add>, %138, %cst_122 [1] : vector<8x512xf32> to vector<8xf32>
    %140 = vector.shape_cast %139 : vector<8xf32> to vector<8x1xf32>
    %cst_123 = arith.constant 3.906250e-03 : f32
    %141 = vector.broadcast %cst_123 : f32 to vector<8x1xf32>
    %142 = arith.mulf %140, %141 : vector<8x1xf32>
    %143 = arith.mulf %138, %136 : vector<8x512xf32>
    %cst_124 = arith.constant dense<0.000000e+00> : vector<8xf32>
    %144 = vector.multi_reduction <add>, %143, %cst_124 [1] : vector<8x512xf32> to vector<8xf32>
    %145 = vector.shape_cast %144 : vector<8xf32> to vector<8x1xf32>
    %cst_125 = arith.constant 3.906250e-03 : f32
    %146 = vector.broadcast %cst_125 : f32 to vector<8x1xf32>
    %147 = arith.mulf %145, %146 : vector<8x1xf32>
    %148 = arith.mulf %142, %142 : vector<8x1xf32>
    %149 = arith.subf %147, %148 : vector<8x1xf32>
    %150 = vector.broadcast %142 : vector<8x1xf32> to vector<8x512xf32>
    %151 = arith.subf %136, %150 : vector<8x512xf32>
    %cst_126 = arith.constant 9.99999974E-6 : f32
    %152 = vector.broadcast %cst_126 : f32 to vector<8x1xf32>
    %153 = arith.addf %149, %152 : vector<8x1xf32>
    %154 = math.rsqrt %153 : vector<8x1xf32>
    %155 = vector.broadcast %154 : vector<8x1xf32> to vector<8x512xf32>
    %156 = arith.mulf %151, %155 : vector<8x512xf32>
    %cst_127 = arith.constant 0.000000e+00 : f32
    %157 = vector.broadcast %cst_127 : f32 to vector<8x512xf32>
    %158 = arith.cmpf oge, %156, %157 : vector<8x512xf32>
    %159 = vector.broadcast %89 : f32 to vector<8x512xf32>
    %160 = arith.mulf %159, %156 : vector<8x512xf32>
    %161 = arith.select %158, %156, %160 : vector<8x512xi1>, vector<8x512xf32>
    %c0_128 = arith.constant 0 : index
    %c0_129 = arith.constant 0 : index
    %c0_130 = arith.constant 0 : index
    %162 = vector.load %arg9[%c0_128, %c0_129, %c0_130] : memref<1x8x512xf32, #tpu.memory_space<vmem>>, vector<1x8x512xf32>
    %163 = vector.shape_cast %162 : vector<1x8x512xf32> to vector<8x512xf32>
    %164 = vector.shape_cast %161 : vector<8x512xf32> to vector<1x8x512xf32>
    tpu.vector_store %arg9[%c0_128, %c0_129, %c0_130], %164 {strides = array<i32>} : memref<1x8x512xf32, #tpu.memory_space<vmem>>, vector<1x8x512xf32>,
    return
  }
  func.func @transform_0(%arg0: i32) -> (i32, i32, i32) {
    %c0_i32 = arith.constant 0 : i32
    %c0_i32_0 = arith.constant 0 : i32
    %c0_i32_1 = arith.constant 0 : i32
    return %arg0, %c0_i32, %c0_i32_0 : i32, i32, i32
  }
  func.func @transform_1(%arg0: i32) -> (i32, i32) {
    %c0_i32 = arith.constant 0 : i32
    %c0_i32_0 = arith.constant 0 : i32
    %c0_i32_1 = arith.constant 0 : i32
    return %c0_i32, %c0_i32_0 : i32, i32
  }
  func.func @transform_2(%arg0: i32) -> (i32, i32, i32) {
    %c0_i32 = arith.constant 0 : i32
    %c0_i32_0 = arith.constant 0 : i32
    %c0_i32_1 = arith.constant 0 : i32
    %c0_i32_2 = arith.constant 0 : i32
    return %c0_i32, %c0_i32_0, %c0_i32_1 : i32, i32, i32
  }
  func.func @transform_3(%arg0: i32) -> (i32, i32) {
    %c0_i32 = arith.constant 0 : i32
    %c0_i32_0 = arith.constant 0 : i32
    %c0_i32_1 = arith.constant 0 : i32
    return %c0_i32, %c0_i32_0 : i32, i32
  }
  func.func @transform_4(%arg0: i32) -> (i32, i32) {
    %c0_i32 = arith.constant 0 : i32
    %c0_i32_0 = arith.constant 0 : i32
    %c0_i32_1 = arith.constant 0 : i32
    return %c0_i32, %c0_i32_0 : i32, i32
  }
  func.func @transform_5(%arg0: i32) -> (i32, i32, i32) {
    %c0_i32 = arith.constant 0 : i32
    %c0_i32_0 = arith.constant 0 : i32
    %c0_i32_1 = arith.constant 0 : i32
    %c0_i32_2 = arith.constant 0 : i32
    return %c0_i32, %c0_i32_0, %c0_i32_1 : i32, i32, i32
  }
  func.func @transform_6(%arg0: i32) -> (i32, i32) {
    %c0_i32 = arith.constant 0 : i32
    %c0_i32_0 = arith.constant 0 : i32
    %c0_i32_1 = arith.constant 0 : i32
    return %c0_i32, %c0_i32_0 : i32, i32
  }
  func.func @transform_7(%arg0: i32) -> (i32, i32) {
    %c0_i32 = arith.constant 0 : i32
    %c0_i32_0 = arith.constant 0 : i32
    %c0_i32_1 = arith.constant 0 : i32
    return %c0_i32, %c0_i32_0 : i32, i32
  }
  func.func @transform_8(%arg0: i32) -> (i32, i32, i32) {
    %c0_i32 = arith.constant 0 : i32
    %c0_i32_0 = arith.constant 0 : i32
    %c0_i32_1 = arith.constant 0 : i32
    return %arg0, %c0_i32, %c0_i32_0 : i32, i32, i32
  }
}

</mosaic_0001>

<llo_original>
// kernel: tpu_custom_call.1
$region0: #{tpu_custom_call.1}
  #allocation0 [shape = 'u32[]', space=smem, size = 0x4, offset = 0x4, fixed_abs, tag = 'smem constant byte address 0x4 - core index']
  #allocation1 [shape = 'u32[72,128]{1,0:T(1,128)}', space=vmem, size = 0x9000, scoped, tag = 'internal scratch']
  #allocation2 [shape = 'bf16[8,534]{1,0:T(8,128)(2,1)}', space=vmem, size = 0x2800, scoped, tag = 'scratch operand']
  #allocation3 [shape = 'f32[1,1]{1,0:T(1,128)S(6)}', space=smem, size = 0x200, scoped, tag = 'scoped memory for tpu_custom_call.1']
  #allocation4 [shape = 'f32[1,1]{1,0:T(1,128)S(6)}', space=smem, size = 0x200, scoped, tag = 'scoped memory for tpu_custom_call.1']
  %s0 = inlined_call_operand.vmem [shape: bf16[2,8,534], index: 0, kind: input, shape index: {}]
  %s1 = inlined_call_operand.vmem [shape: f32[1,512], index: 1, kind: input, shape index: {}]
  %s2 = inlined_call_operand.vmem [shape: bf16[9,8,8], index: 2, kind: input, shape index: {}]
  %s3 = inlined_call_operand.vmem [shape: f32[8,1], index: 3, kind: input, shape index: {}]
  %s4 = inlined_call_operand.<no memory space> [shape: f32[1,1], index: 4, kind: input, shape index: {}]
  %s5 = inlined_call_operand.vmem [shape: bf16[9,8,8], index: 5, kind: input, shape index: {}]
  %s6 = inlined_call_operand.vmem [shape: f32[8,1], index: 6, kind: input, shape index: {}]
  %s7 = inlined_call_operand.<no memory space> [shape: f32[1,1], index: 7, kind: input, shape index: {}]
  %s8 = inlined_call_operand.hbm [shape: f32[2,8,512], index: 8, kind: output, shape index: {}]
  %s9 = sld [smem:[#allocation0]]
  $region65: #{tpu_custom_call.1} parent=0
    _
  %s11 = ssub.s32 1, %s9
  %s12 = scalar_select 0, %s11, %s9
  %13 = sst [smem:[#allocation3]] %s4
  %14 = sst [smem:[#allocation4]] %s7
  $region1: #{tpu_custom_call.1} parent=0
    #allocation5 [shape = 'u8[32768]{0}', space=vmem, size = 0x8000, scoped, tag = 'output window, operand 0']
    #allocation6 [shape = 's32[2]{0}', space=sflag, size = 0x8, scoped, tag = 'scoped memory for tpu_custom_call.1']
    %15 = vsyncpa [#allocation6], 0
    %s16 = scalar_lea.sflag [#allocation6], 1
    %17 = vsyncpa %s16, 0
    loop: start=0, step=1, limit=4
    $region2: #{tpu_custom_call.1} parent=1 // loop_pre_header
      _
    $region3: #{tpu_custom_call.1} parent=1 // loop_header
      %s19 = sphi 0, %s23
      %p20 = scmp.ge.s32.totalorder %s19, 4
      %s29 = sphi 0, %s31
      %s32 = sphi 0, %s29
      %s33 = sphi 0, %s32
      %s49 = sphi 0, %s33
      %s53 = sphi 0, %s53
      %s55 = sphi 0, %s53
      %s56 = sphi 0, %s55
      %s70 = sphi 0, %s56
      %s74 = sphi 0, %s74
      %s76 = sphi 0, %s74
      %s77 = sphi 0, %s76
      %s91 = sphi 0, %s77
      %s95 = sphi 0, %s95
      %s97 = sphi 0, %s95
      %s98 = sphi 0, %s97
      %s112 = sphi 0, %s98
      %s116 = sphi 0, %s116
      %s118 = sphi 0, %s116
      %s119 = sphi 0, %s118
      %s133 = sphi 0, %s119
      %s137 = sphi 0, %s137
      %s139 = sphi 0, %s137
      %s140 = sphi 0, %s139
      %s154 = sphi 0, %s140
      %s158 = sphi 0, %s158
      %s160 = sphi 0, %s158
      %s161 = sphi 0, %s160
      %s175 = sphi 0, %s161
      %s179 = sphi 0, %s179
      %s181 = sphi 0, %s179
      %s182 = sphi 0, %s181
      %s196 = sphi 0, %s182
      %s202 = sphi 0, %s204
      %s205 = sphi 0, %s202
      %s206 = sphi 0, %s205
      %s222 = sphi 0, %s206
    $region4: #{tpu_custom_call.1} parent=1 // loop_header_branch
      %22 = sbr.rel (%p20) target = $region8
    $region5: #{tpu_custom_call.1} parent=1 // loop_body
      %s24 = ssub.s32 %s19, 1
      %s25 = ssub.s32 %s19, 2
      %s26 = sadd.s32 %s19, 1
      %s27 = ssub.s32 %s19, %s26
      %p28 = scmp.eq.s32.totalorder %s27, 0
      %s30 = sadd.s32 %s29, 1
      %s31 = scalar_select %p28, %s29, %s30
      %p34 = pneg %p28
      %p35 = scmp.eq.s32.totalorder %s19, 1
      %p36 = por %p34, %p35
      %p37 = scmp.ne.s32.totalorder %s29, %s32
      %p38 = scmp.eq.s32.totalorder %s19, 0
      %p39 = por %p37, %p38
      %p40 = scmp.ne.s32.totalorder %s29, %s32
      %p41 = scmp.eq.s32.totalorder %s24, 1
      %p42 = por %p40, %p41
      %p43 = scmp.ne.s32.totalorder %s32, %s33
      %p44 = scmp.eq.s32.totalorder %s24, 0
      %p45 = por %p43, %p44
      %p46 = scmp.ne.s32.totalorder %s32, %s33
      %p47 = scmp.eq.s32.totalorder %s25, 1
      %p48 = por %p46, %p47
      %p50 = scmp.ne.s32.totalorder %s33, %s49
      %p51 = scmp.eq.s32.totalorder %s25, 0
      %p52 = por %p50, %p51
      %s54 = sadd.s32 %s53, 1
      %p57 = scmp.eq.s32.totalorder %s19, 1
      %p58 = scmp.ne.s32.totalorder %s53, %s55
      %p59 = scmp.eq.s32.totalorder %s19, 0
      %p60 = por %p58, %p59
      %p61 = scmp.ne.s32.totalorder %s53, %s55
      %p62 = scmp.eq.s32.totalorder %s24, 1
      %p63 = por %p61, %p62
      %p64 = scmp.ne.s32.totalorder %s55, %s56
      %p65 = scmp.eq.s32.totalorder %s24, 0
      %p66 = por %p64, %p65
      %p67 = scmp.ne.s32.totalorder %s55, %s56
      %p68 = scmp.eq.s32.totalorder %s25, 1
      %p69 = por %p67, %p68
      %p71 = scmp.ne.s32.totalorder %s56, %s70
      %p72 = scmp.eq.s32.totalorder %s25, 0
      %p73 = por %p71, %p72
      %s75 = sadd.s32 %s74, 1
      %p78 = scmp.eq.s32.totalorder %s19, 1
      %p79 = scmp.ne.s32.totalorder %s74, %s76
      %p80 = scmp.eq.s32.totalorder %s19, 0
      %p81 = por %p79, %p80
      %p82 = scmp.ne.s32.totalorder %s74, %s76
      %p83 = scmp.eq.s32.totalorder %s24, 1
      %p84 = por %p82, %p83
      %p85 = scmp.ne.s32.totalorder %s76, %s77
      %p86 = scmp.eq.s32.totalorder %s24, 0
      %p87 = por %p85, %p86
      %p88 = scmp.ne.s32.totalorder %s76, %s77
      %p89 = scmp.eq.s32.totalorder %s25, 1
      %p90 = por %p88, %p89
      %p92 = scmp.ne.s32.totalorder %s77, %s91
      %p93 = scmp.eq.s32.totalorder %s25, 0
      %p94 = por %p92, %p93
      %s96 = sadd.s32 %s95, 1
      %p99 = scmp.eq.s32.totalorder %s19, 1
      %p100 = scmp.ne.s32.totalorder %s95, %s97
      %p101 = scmp.eq.s32.totalorder %s19, 0
      %p102 = por %p100, %p101
      %p103 = scmp.ne.s32.totalorder %s95, %s97
      %p104 = scmp.eq.s32.totalorder %s24, 1
      %p105 = por %p103, %p104
      %p106 = scmp.ne.s32.totalorder %s97, %s98
      %p107 = scmp.eq.s32.totalorder %s24, 0
      %p108 = por %p106, %p107
      %p109 = scmp.ne.s32.totalorder %s97, %s98
      %p110 = scmp.eq.s32.totalorder %s25, 1
      %p111 = por %p109, %p110
      %p113 = scmp.ne.s32.totalorder %s98, %s112
      %p114 = scmp.eq.s32.totalorder %s25, 0
      %p115 = por %p113, %p114
      %s117 = sadd.s32 %s116, 1
      %p120 = scmp.eq.s32.totalorder %s19, 1
      %p121 = scmp.ne.s32.totalorder %s116, %s118
      %p122 = scmp.eq.s32.totalorder %s19, 0
      %p123 = por %p121, %p122
      %p124 = scmp.ne.s32.totalorder %s116, %s118
      %p125 = scmp.eq.s32.totalorder %s24, 1
      %p126 = por %p124, %p125
      %p127 = scmp.ne.s32.totalorder %s118, %s119
      %p128 = scmp.eq.s32.totalorder %s24, 0
      %p129 = por %p127, %p128
      %p130 = scmp.ne.s32.totalorder %s118, %s119
      %p131 = scmp.eq.s32.totalorder %s25, 1
      %p132 = por %p130, %p131
      %p134 = scmp.ne.s32.totalorder %s119, %s133
      %p135 = scmp.eq.s32.totalorder %s25, 0
      %p136 = por %p134, %p135
      %s138 = sadd.s32 %s137, 1
      %p141 = scmp.eq.s32.totalorder %s19, 1
      %p142 = scmp.ne.s32.totalorder %s137, %s139
      %p143 = scmp.eq.s32.totalorder %s19, 0
      %p144 = por %p142, %p143
      %p145 = scmp.ne.s32.totalorder %s137, %s139
      %p146 = scmp.eq.s32.totalorder %s24, 1
      %p147 = por %p145, %p146
      %p148 = scmp.ne.s32.totalorder %s139, %s140
      %p149 = scmp.eq.s32.totalorder %s24, 0
      %p150 = por %p148, %p149
      %p151 = scmp.ne.s32.totalorder %s139, %s140
      %p152 = scmp.eq.s32.totalorder %s25, 1
      %p153 = por %p151, %p152
      %p155 = scmp.ne.s32.totalorder %s140, %s154
      %p156 = scmp.eq.s32.totalorder %s25, 0
      %p157 = por %p155, %p156
      %s159 = sadd.s32 %s158, 1
      %p162 = scmp.eq.s32.totalorder %s19, 1
      %p163 = scmp.ne.s32.totalorder %s158, %s160
      %p164 = scmp.eq.s32.totalorder %s19, 0
      %p165 = por %p163, %p164
      %p166 = scmp.ne.s32.totalorder %s158, %s160
      %p167 = scmp.eq.s32.totalorder %s24, 1
      %p168 = por %p166, %p167
      %p169 = scmp.ne.s32.totalorder %s160, %s161
      %p170 = scmp.eq.s32.totalorder %s24, 0
      %p171 = por %p169, %p170
      %p172 = scmp.ne.s32.totalorder %s160, %s161
      %p173 = scmp.eq.s32.totalorder %s25, 1
      %p174 = por %p172, %p173
      %p176 = scmp.ne.s32.totalorder %s161, %s175
      %p177 = scmp.eq.s32.totalorder %s25, 0
      %p178 = por %p176, %p177
      %s180 = sadd.s32 %s179, 1
      %p183 = scmp.eq.s32.totalorder %s19, 1
      %p184 = scmp.ne.s32.totalorder %s179, %s181
      %p185 = scmp.eq.s32.totalorder %s19, 0
      %p186 = por %p184, %p185
      %p187 = scmp.ne.s32.totalorder %s179, %s181
      %p188 = scmp.eq.s32.totalorder %s24, 1
      %p189 = por %p187, %p188
      %p190 = scmp.ne.s32.totalorder %s181, %s182
      %p191 = scmp.eq.s32.totalorder %s24, 0
      %p192 = por %p190, %p191
      %p193 = scmp.ne.s32.totalorder %s181, %s182
      %p194 = scmp.eq.s32.totalorder %s25, 1
      %p195 = por %p193, %p194
      %p197 = scmp.ne.s32.totalorder %s182, %s196
      %p198 = scmp.eq.s32.totalorder %s25, 0
      %p199 = por %p197, %p198
      %s200 = ssub.s32 %s19, %s26
      %p201 = scmp.eq.s32.totalorder %s200, 0
      %s203 = sadd.s32 %s202, 1
      %s204 = scalar_select %p201, %s202, %s203
      %p207 = pneg %p201
      %p208 = scmp.eq.s32.totalorder %s19, 1
      %p209 = por %p207, %p208
      %p210 = scmp.ne.s32.totalorder %s202, %s205
      %p211 = scmp.eq.s32.totalorder %s19, 0
      %p212 = por %p210, %p211
      %p213 = scmp.ne.s32.totalorder %s202, %s205
      %p214 = scmp.eq.s32.totalorder %s24, 1
      %p215 = por %p213, %p214
      %p216 = scmp.ne.s32.totalorder %s205, %s206
      %p217 = scmp.eq.s32.totalorder %s24, 0
      %p218 = por %p216, %p217
      %p219 = scmp.ne.s32.totalorder %s205, %s206
      %p220 = scmp.eq.s32.totalorder %s25, 1
      %p221 = por %p219, %p220
      %p223 = scmp.ne.s32.totalorder %s206, %s222
      %p224 = scmp.eq.s32.totalorder %s25, 0
      %p225 = por %p223, %p224
      %p226 = scmp.le.s32.totalorder 1, %s19
      %p227 = scmp.lt.s32.totalorder %s19, 3
      %p228 = pnand %p226, %p227
      %p229 = pneg %p228
      // Predicated region
      $region9: #{tpu_custom_call.1} parent=5 // pred_check
        _
      $region10: #{tpu_custom_call.1} parent=5 // pred_check_branch
        %231 = sbr.rel (%p228) target = $region12
      $region11: #{tpu_custom_call.1} parent=5 // pred_region
        %s232 = ssub.s32 %s19, 1
        // Predicated region
        $region13: #{tpu_custom_call.1} parent=11 // pred_check
          %p233 = pneg %p66
        $region14: #{tpu_custom_call.1} parent=11 // pred_check_branch
          %235 = sbr.rel (%p233) target = $region16
        $region15: #{tpu_custom_call.1} parent=11 // pred_region
          _
        $region16: #{tpu_custom_call.1} parent=11 // pred_fallthru
          _
        // Predicated region
        $region17: #{tpu_custom_call.1} parent=11 // pred_check
          %p236 = pneg %p87
        $region18: #{tpu_custom_call.1} parent=11 // pred_check_branch
          %238 = sbr.rel (%p236) target = $region20
        $region19: #{tpu_custom_call.1} parent=11 // pred_region
          _
        $region20: #{tpu_custom_call.1} parent=11 // pred_fallthru
          _
        // Predicated region
        $region21: #{tpu_custom_call.1} parent=11 // pred_check
          %p239 = pneg %p108
        $region22: #{tpu_custom_call.1} parent=11 // pred_check_branch
          %241 = sbr.rel (%p239) target = $region24
        $region23: #{tpu_custom_call.1} parent=11 // pred_region
          _
        $region24: #{tpu_custom_call.1} parent=11 // pred_fallthru
          _
        // Predicated region
        $region25: #{tpu_custom_call.1} parent=11 // pred_check
          %p242 = pneg %p129
        $region26: #{tpu_custom_call.1} parent=11 // pred_check_branch
          %244 = sbr.rel (%p242) target = $region28
        $region27: #{tpu_custom_call.1} parent=11 // pred_region
          _
        $region28: #{tpu_custom_call.1} parent=11 // pred_fallthru
          _
        // Predicated region
        $region29: #{tpu_custom_call.1} parent=11 // pred_check
          %p245 = pneg %p150
        $region30: #{tpu_custom_call.1} parent=11 // pred_check_branch
          %247 = sbr.rel (%p245) target = $region32
        $region31: #{tpu_custom_call.1} parent=11 // pred_region
          _
        $region32: #{tpu_custom_call.1} parent=11 // pred_fallthru
          _
        // Predicated region
        $region33: #{tpu_custom_call.1} parent=11 // pred_check
          %p248 = pneg %p171
        $region34: #{tpu_custom_call.1} parent=11 // pred_check_branch
          %250 = sbr.rel (%p248) target = $region36
        $region35: #{tpu_custom_call.1} parent=11 // pred_region
          _
        $region36: #{tpu_custom_call.1} parent=11 // pred_fallthru
          _
        // Predicated region
        $region37: #{tpu_custom_call.1} parent=11 // pred_check
          %p251 = pneg %p192
        $region38: #{tpu_custom_call.1} parent=11 // pred_check_branch
          %253 = sbr.rel (%p251) target = $region40
        $region39: #{tpu_custom_call.1} parent=11 // pred_region
          _
        $region40: #{tpu_custom_call.1} parent=11 // pred_fallthru
          _
      $region12: #{tpu_custom_call.1} parent=5 // pred_fallthru
        _
      %p254 = scmp.lt.s32.totalorder %s19, 2
      // Predicated region
      $region41: #{tpu_custom_call.1} parent=5 // pred_check
        %p255 = pneg %p254
      $region42: #{tpu_custom_call.1} parent=5 // pred_check_branch
        %257 = sbr.rel (%p255) target = $region44
      $region43: #{tpu_custom_call.1} parent=5 // pred_region
        // Predicated region
        $region45: #{tpu_custom_call.1} parent=43 // pred_check
          %p258 = pneg %p39
        $region46: #{tpu_custom_call.1} parent=43 // pred_check_branch
          %260 = sbr.rel (%p258) target = $region48
        $region47: #{tpu_custom_call.1} parent=43 // pred_region
          %p261 = scmp.lt.s32.totalorder %s19, 1
          %s262 = scalar_select %p261, %s19, 1
          %s263 = smul.addr %s262, 5
          %s264 = smul.addr %s263, 4
          %s265 = scalar_lea.vmem %s0, %s264
        $region48: #{tpu_custom_call.1} parent=43 // pred_fallthru
          _
      $region44: #{tpu_custom_call.1} parent=5 // pred_fallthru
        _
      %p266 = scmp.le.s32.totalorder 1, %s19
      %p267 = scmp.lt.s32.totalorder %s19, 3
      %p268 = pnand %p266, %p267
      %p269 = pneg %p268
      // Predicated region
      $region49: #{tpu_custom_call.1} parent=5 // pred_check
        _
      $region50: #{tpu_custom_call.1} parent=5 // pred_check_branch
        %271 = sbr.rel (%p268) target = $region52
      $region51: #{tpu_custom_call.1} parent=5 // pred_region
        %s272 = ssub.s32 %s19, 1
        %p273 = scmp.lt.s32.totalorder %s24, 1
        %s274 = scalar_select %p273, %s24, 1
        %s275 = smul.addr %s274, 5
        %s276 = smul.addr %s275, 4
        %s277 = scalar_lea.vmem %s0, %s276
        %p278 = pneg %p45
        %p279 = pneg %p42
        %p280 = pneg %p66
        %p281 = pneg %p63
        %p282 = pneg %p87
        %p283 = pneg %p84
        %p284 = pneg %p108
        %p285 = pneg %p105
        %p286 = pneg %p129
        %p287 = pneg %p126
        %p288 = pneg %p150
        %p289 = pneg %p147
        %p290 = pneg %p171
        %p291 = pneg %p168
        %p292 = pneg %p192
        %p293 = pneg %p189
        %p294 = pneg %p218
        %p295 = pneg %p215
        %s296 = sand.u32 %s205, 1
        %s297 = scalar_lea.sflag [#allocation6], %s296
        %s298 = sand.u32 %s205, 1
        %s299 = smul.addr %s298, 32
        %s300 = scalar_lea.vmem [#allocation5], %s299
        %p301 = scmp.lt.s32.totalorder %s24, 1
        %s302 = scalar_select %p301, %s24, 1
        %s303 = smul.addr %s302, 5
        %s304 = smul.addr %s303, 4
        %s305 = scalar_lea.vmem %s0, %s304
        %v307 = vld [vmem:[%s1] sm:$0xf]
        %s308 = sld [smem:[#allocation3]]
        %v309 = vld [vmem:[%s2] sm:$0xf]
        %v310 = vld [vmem:[%s305] sm:$0xff]
        %v311 = vld [vmem:[%s305 + $0x8] sm:$0xff]
        %s312 = scalar_lea.vmem %s2, 4
        %v313 = vld [vmem:[%s312] sm:$0xf]
        %v314 = vld [vmem:[%s305 + $0x10] sm:$0xf]
        %v318 = vunpack.c.l.b16 %v310
        %v319 = vunpack.c.h.b16 %v310
        %v320 = vunpack.c.l.b16 %v311
        %v321 = vunpack.c.h.b16 %v311
        %v322 = vunpack.c.l.b16 %v314
        %v323 = vpack.c.b16 %v318, %v318
        %v324 = vpack.c.b16 %v319, %v319
        %v325 = vpack.c.b16 %v320, %v320
        %v326 = vpack.c.b16 %v321, %v321
        %v327 = vpack.c.b16 %v322, %v322
        %328 = vrot.lane.b32.xlu0 %v323, 127
        %v329 = vpop.permute.xlu0 %328
        %330 = vrot.lane.b32.xlu0 %v324, 127
        %v331 = vpop.permute.xlu0 %330
        %332 = vrot.lane.b32.xlu0 %v325, 127
        %v333 = vpop.permute.xlu0 %332
        %334 = vrot.lane.b32.xlu0 %v326, 127
        %v335 = vpop.permute.xlu0 %334
        %336 = vrot.lane.b32.xlu0 %v327, 127
        %v337 = vpop.permute.xlu0 %336
        %vm338 = vcmask 1039360
        %v339 = vsel %vm338, %v329, %v331
        %v340 = vsel %vm338, %v331, %v333
        %v341 = vsel %vm338, %v333, %v335
        %v342 = vsel %vm338, %v335, %v337
        %vm343 = vcmask 64512
        %v345 = vsel %vm343, %v313, 0
        %vm347 = vcmask 1043456
        %v349 = vsel %vm347, %v339, 0
        %v352 = vsel %vm347, %v340, 0
        %v355 = vsel %vm347, %v341, 0
        %v358 = vsel %vm347, %v342, 0
        %360 = vmatpush.bf16.msra.mxu0 0
        %361 = vmatpush.bf16.msra.mxu0 0
        %362 = vmatpush.bf16.msra.mxu0 0
        %363 = vmatpush.bf16.msra.mxu0 0
        %364 = vmatpush.bf16.msra.mxu0 0
        %365 = vmatpush.bf16.msra.mxu0 0
        %366 = vmatpush.bf16.msra.mxu0 0
        %367 = vmatpush.bf16.msra.mxu0 %v349
        %368 = vmatmul.bf16.gmra.mxu0 %v345
        %v369 = vpop.f32.mrf.mxu0
        %v370 = vadd.f32 0.0, %v369
        %v371 = vpop.f32.mrf.mxu0
        %372 = vdwg.mxu0
        %373 = vmatpush.bf16.msra.mxu0 0
        %374 = vmatpush.bf16.msra.mxu0 0
        %375 = vmatpush.bf16.msra.mxu0 0
        %376 = vmatpush.bf16.msra.mxu0 0
        %377 = vmatpush.bf16.msra.mxu0 0
        %378 = vmatpush.bf16.msra.mxu0 0
        %379 = vmatpush.bf16.msra.mxu0 0
        %380 = vmatpush.bf16.msra.mxu0 %v352
        %381 = vmatmul.bf16.gmra.mxu0 %v345
        %v382 = vpop.f32.mrf.mxu0
        %v383 = vadd.f32 0.0, %v382
        %v384 = vpop.f32.mrf.mxu0
        %385 = vdwg.mxu0
        %386 = vmatpush.bf16.msra.mxu0 0
        %387 = vmatpush.bf16.msra.mxu0 0
        %388 = vmatpush.bf16.msra.mxu0 0
        %389 = vmatpush.bf16.msra.mxu0 0
        %390 = vmatpush.bf16.msra.mxu0 0
        %391 = vmatpush.bf16.msra.mxu0 0
        %392 = vmatpush.bf16.msra.mxu0 0
        %393 = vmatpush.bf16.msra.mxu0 %v355
        %394 = vmatmul.bf16.gmra.mxu0 %v345
        %v395 = vpop.f32.mrf.mxu0
        %v396 = vadd.f32 0.0, %v395
        %v397 = vpop.f32.mrf.mxu0
        %398 = vdwg.mxu0
        %399 = vmatpush.bf16.msra.mxu0 0
        %400 = vmatpush.bf16.msra.mxu0 0
        %401 = vmatpush.bf16.msra.mxu0 0
        %402 = vmatpush.bf16.msra.mxu0 0
        %403 = vmatpush.bf16.msra.mxu0 0
        %404 = vmatpush.bf16.msra.mxu0 0
        %405 = vmatpush.bf16.msra.mxu0 0
        %406 = vmatpush.bf16.msra.mxu0 %v358
        %407 = vmatmul.bf16.gmra.mxu0 %v345
        %v408 = vpop.f32.mrf.mxu0
        %v409 = vadd.f32 0.0, %v408
        %v410 = vpop.f32.mrf.mxu0
        %411 = vdwg.mxu0
        %v413 = vsel %vm343, %v309, 0
        %v416 = vsel %vm347, %v323, 0
        %v419 = vsel %vm347, %v324, 0
        %v422 = vsel %vm347, %v325, 0
        %v425 = vsel %vm347, %v326, 0
        %427 = vmatpush.bf16.msra.mxu0 0
        %428 = vmatpush.bf16.msra.mxu0 0
        %429 = vmatpush.bf16.msra.mxu0 0
        %430 = vmatpush.bf16.msra.mxu0 0
        %431 = vmatpush.bf16.msra.mxu0 0
        %432 = vmatpush.bf16.msra.mxu0 0
        %433 = vmatpush.bf16.msra.mxu0 0
        %434 = vmatpush.bf16.msra.mxu0 %v416
        %435 = vmatmul.bf16.gmra.mxu0 %v413
        %v436 = vpop.f32.mrf.mxu0
        %v437 = vadd.f32 %v370, %v436
        %v438 = vpop.f32.mrf.mxu0
        %439 = vdwg.mxu0
        %440 = vmatpush.bf16.msra.mxu0 0
        %441 = vmatpush.bf16.msra.mxu0 0
        %442 = vmatpush.bf16.msra.mxu0 0
        %443 = vmatpush.bf16.msra.mxu0 0
        %444 = vmatpush.bf16.msra.mxu0 0
        %445 = vmatpush.bf16.msra.mxu0 0
        %446 = vmatpush.bf16.msra.mxu0 0
        %447 = vmatpush.bf16.msra.mxu0 %v419
        %448 = vmatmul.bf16.gmra.mxu0 %v413
        %v449 = vpop.f32.mrf.mxu0
        %v450 = vadd.f32 %v383, %v449
        %v451 = vpop.f32.mrf.mxu0
        %452 = vdwg.mxu0
        %453 = vmatpush.bf16.msra.mxu0 0
        %454 = vmatpush.bf16.msra.mxu0 0
        %455 = vmatpush.bf16.msra.mxu0 0
        %456 = vmatpush.bf16.msra.mxu0 0
        %457 = vmatpush.bf16.msra.mxu0 0
        %458 = vmatpush.bf16.msra.mxu0 0
        %459 = vmatpush.bf16.msra.mxu0 0
        %460 = vmatpush.bf16.msra.mxu0 %v422
        %461 = vmatmul.bf16.gmra.mxu0 %v413
        %v462 = vpop.f32.mrf.mxu0
        %v463 = vadd.f32 %v396, %v462
        %v464 = vpop.f32.mrf.mxu0
        %465 = vdwg.mxu0
        %466 = vmatpush.bf16.msra.mxu0 0
        %467 = vmatpush.bf16.msra.mxu0 0
        %468 = vmatpush.bf16.msra.mxu0 0
        %469 = vmatpush.bf16.msra.mxu0 0
        %470 = vmatpush.bf16.msra.mxu0 0
        %471 = vmatpush.bf16.msra.mxu0 0
        %472 = vmatpush.bf16.msra.mxu0 0
        %473 = vmatpush.bf16.msra.mxu0 %v425
        %474 = vmatmul.bf16.gmra.mxu0 %v413
        %v475 = vpop.f32.mrf.mxu0
        %v476 = vadd.f32 %v409, %v475
        %v477 = vpop.f32.mrf.mxu0
        %478 = vdwg.mxu0
        %s479 = scalar_lea.vmem %s2, 8
        %v480 = vld [vmem:[%s479] sm:$0xf]
        %481 = vrot.lane.b32.xlu0 %v323, 126
        %v482 = vpop.permute.xlu0 %481
        %483 = vrot.lane.b32.xlu0 %v324, 126
        %v484 = vpop.permute.xlu0 %483
        %485 = vrot.lane.b32.xlu0 %v325, 126
        %v486 = vpop.permute.xlu0 %485
        %487 = vrot.lane.b32.xlu0 %v326, 126
        %v488 = vpop.permute.xlu0 %487
        %489 = vrot.lane.b32.xlu0 %v327, 126
        %v490 = vpop.permute.xlu0 %489
        %vm491 = vcmask 1031168
        %v492 = vsel %vm491, %v482, %v484
        %v493 = vsel %vm491, %v484, %v486
        %v494 = vsel %vm491, %v486, %v488
        %v495 = vsel %vm491, %v488, %v490
        %v497 = vsel %vm343, %v480, 0
        %v500 = vsel %vm347, %v492, 0
        %v503 = vsel %vm347, %v493, 0
        %v506 = vsel %vm347, %v494, 0
        %v509 = vsel %vm347, %v495, 0
        %511 = vmatpush.bf16.msra.mxu0 0
        %512 = vmatpush.bf16.msra.mxu0 0
        %513 = vmatpush.bf16.msra.mxu0 0
        %514 = vmatpush.bf16.msra.mxu0 0
        %515 = vmatpush.bf16.msra.mxu0 0
        %516 = vmatpush.bf16.msra.mxu0 0
        %517 = vmatpush.bf16.msra.mxu0 0
        %518 = vmatpush.bf16.msra.mxu0 %v500
        %519 = vmatmul.bf16.gmra.mxu0 %v497
        %v520 = vpop.f32.mrf.mxu0
        %v521 = vadd.f32 0.0, %v520
        %v522 = vpop.f32.mrf.mxu0
        %523 = vdwg.mxu0
        %524 = vmatpush.bf16.msra.mxu0 0
        %525 = vmatpush.bf16.msra.mxu0 0
        %526 = vmatpush.bf16.msra.mxu0 0
        %527 = vmatpush.bf16.msra.mxu0 0
        %528 = vmatpush.bf16.msra.mxu0 0
        %529 = vmatpush.bf16.msra.mxu0 0
        %530 = vmatpush.bf16.msra.mxu0 0
        %531 = vmatpush.bf16.msra.mxu0 %v503
        %532 = vmatmul.bf16.gmra.mxu0 %v497
        %v533 = vpop.f32.mrf.mxu0
        %v534 = vadd.f32 0.0, %v533
        %v535 = vpop.f32.mrf.mxu0
        %536 = vdwg.mxu0
        %537 = vmatpush.bf16.msra.mxu0 0
        %538 = vmatpush.bf16.msra.mxu0 0
        %539 = vmatpush.bf16.msra.mxu0 0
        %540 = vmatpush.bf16.msra.mxu0 0
        %541 = vmatpush.bf16.msra.mxu0 0
        %542 = vmatpush.bf16.msra.mxu0 0
        %543 = vmatpush.bf16.msra.mxu0 0
        %544 = vmatpush.bf16.msra.mxu0 %v506
        %545 = vmatmul.bf16.gmra.mxu0 %v497
        %v546 = vpop.f32.mrf.mxu0
        %v547 = vadd.f32 0.0, %v546
        %v548 = vpop.f32.mrf.mxu0
        %549 = vdwg.mxu0
        %550 = vmatpush.bf16.msra.mxu0 0
        %551 = vmatpush.bf16.msra.mxu0 0
        %552 = vmatpush.bf16.msra.mxu0 0
        %553 = vmatpush.bf16.msra.mxu0 0
        %554 = vmatpush.bf16.msra.mxu0 0
        %555 = vmatpush.bf16.msra.mxu0 0
        %556 = vmatpush.bf16.msra.mxu0 0
        %557 = vmatpush.bf16.msra.mxu0 %v509
        %558 = vmatmul.bf16.gmra.mxu0 %v497
        %v559 = vpop.f32.mrf.mxu0
        %v560 = vadd.f32 0.0, %v559
        %v561 = vpop.f32.mrf.mxu0
        %562 = vdwg.mxu0
        %v563 = vadd.f32 %v437, %v521
        %v564 = vadd.f32 %v450, %v534
        %v565 = vadd.f32 %v463, %v547
        %v566 = vadd.f32 %v476, %v560
        %s567 = scalar_lea.vmem %s2, 12
        %v568 = vld [vmem:[%s567] sm:$0xf]
        %569 = vrot.lane.b32.xlu0 %v323, 118
        %v570 = vpop.permute.xlu0 %569
        %571 = vrot.lane.b32.xlu0 %v324, 118
        %v572 = vpop.permute.xlu0 %571
        %573 = vrot.lane.b32.xlu0 %v325, 118
        %v574 = vpop.permute.xlu0 %573
        %575 = vrot.lane.b32.xlu0 %v326, 118
        %v576 = vpop.permute.xlu0 %575
        %577 = vrot.lane.b32.xlu0 %v327, 118
        %v578 = vpop.permute.xlu0 %577
        %vm579 = vcmask 965632
        %v580 = vsel %vm579, %v570, %v572
        %v581 = vsel %vm579, %v572, %v574
        %v582 = vsel %vm579, %v574, %v576
        %v583 = vsel %vm579, %v576, %v578
        %v585 = vsel %vm343, %v568, 0
        %v588 = vsel %vm347, %v580, 0
        %v591 = vsel %vm347, %v581, 0
        %v594 = vsel %vm347, %v582, 0
        %v597 = vsel %vm347, %v583, 0
        %599 = vmatpush.bf16.msra.mxu0 0
        %600 = vmatpush.bf16.msra.mxu0 0
        %601 = vmatpush.bf16.msra.mxu0 0
        %602 = vmatpush.bf16.msra.mxu0 0
        %603 = vmatpush.bf16.msra.mxu0 0
        %604 = vmatpush.bf16.msra.mxu0 0
        %605 = vmatpush.bf16.msra.mxu0 0
        %606 = vmatpush.bf16.msra.mxu0 %v588
        %607 = vmatmul.bf16.gmra.mxu0 %v585
        %v608 = vpop.f32.mrf.mxu0
        %v609 = vadd.f32 0.0, %v608
        %v610 = vpop.f32.mrf.mxu0
        %611 = vdwg.mxu0
        %612 = vmatpush.bf16.msra.mxu0 0
        %613 = vmatpush.bf16.msra.mxu0 0
        %614 = vmatpush.bf16.msra.mxu0 0
        %615 = vmatpush.bf16.msra.mxu0 0
        %616 = vmatpush.bf16.msra.mxu0 0
        %617 = vmatpush.bf16.msra.mxu0 0
        %618 = vmatpush.bf16.msra.mxu0 0
        %619 = vmatpush.bf16.msra.mxu0 %v591
        %620 = vmatmul.bf16.gmra.mxu0 %v585
        %v621 = vpop.f32.mrf.mxu0
        %v622 = vadd.f32 0.0, %v621
        %v623 = vpop.f32.mrf.mxu0
        %624 = vdwg.mxu0
        %625 = vmatpush.bf16.msra.mxu0 0
        %626 = vmatpush.bf16.msra.mxu0 0
        %627 = vmatpush.bf16.msra.mxu0 0
        %628 = vmatpush.bf16.msra.mxu0 0
        %629 = vmatpush.bf16.msra.mxu0 0
        %630 = vmatpush.bf16.msra.mxu0 0
        %631 = vmatpush.bf16.msra.mxu0 0
        %632 = vmatpush.bf16.msra.mxu0 %v594
        %633 = vmatmul.bf16.gmra.mxu0 %v585
        %v634 = vpop.f32.mrf.mxu0
        %v635 = vadd.f32 0.0, %v634
        %v636 = vpop.f32.mrf.mxu0
        %637 = vdwg.mxu0
        %638 = vmatpush.bf16.msra.mxu0 0
        %639 = vmatpush.bf16.msra.mxu0 0
        %640 = vmatpush.bf16.msra.mxu0 0
        %641 = vmatpush.bf16.msra.mxu0 0
        %642 = vmatpush.bf16.msra.mxu0 0
        %643 = vmatpush.bf16.msra.mxu0 0
        %644 = vmatpush.bf16.msra.mxu0 0
        %645 = vmatpush.bf16.msra.mxu0 %v597
        %646 = vmatmul.bf16.gmra.mxu0 %v585
        %v647 = vpop.f32.mrf.mxu0
        %v648 = vadd.f32 0.0, %v647
        %v649 = vpop.f32.mrf.mxu0
        %650 = vdwg.mxu0
        %v651 = vadd.f32 %v563, %v609
        %v652 = vadd.f32 %v564, %v622
        %v653 = vadd.f32 %v565, %v635
        %v654 = vadd.f32 %v566, %v648
        %s655 = scalar_lea.vmem %s2, 16
        %v656 = vld [vmem:[%s655] sm:$0xf]
        %657 = vrot.lane.b32.xlu0 %v323, 117
        %v658 = vpop.permute.xlu0 %657
        %659 = vrot.lane.b32.xlu0 %v324, 117
        %v660 = vpop.permute.xlu0 %659
        %661 = vrot.lane.b32.xlu0 %v325, 117
        %v662 = vpop.permute.xlu0 %661
        %663 = vrot.lane.b32.xlu0 %v326, 117
        %v664 = vpop.permute.xlu0 %663
        %665 = vrot.lane.b32.xlu0 %v327, 117
        %v666 = vpop.permute.xlu0 %665
        %vm667 = vcmask 957440
        %v668 = vsel %vm667, %v658, %v660
        %v669 = vsel %vm667, %v660, %v662
        %v670 = vsel %vm667, %v662, %v664
        %v671 = vsel %vm667, %v664, %v666
        %v673 = vsel %vm343, %v656, 0
        %v676 = vsel %vm347, %v668, 0
        %v679 = vsel %vm347, %v669, 0
        %v682 = vsel %vm347, %v670, 0
        %v685 = vsel %vm347, %v671, 0
        %687 = vmatpush.bf16.msra.mxu0 0
        %688 = vmatpush.bf16.msra.mxu0 0
        %689 = vmatpush.bf16.msra.mxu0 0
        %690 = vmatpush.bf16.msra.mxu0 0
        %691 = vmatpush.bf16.msra.mxu0 0
        %692 = vmatpush.bf16.msra.mxu0 0
        %693 = vmatpush.bf16.msra.mxu0 0
        %694 = vmatpush.bf16.msra.mxu0 %v676
        %695 = vmatmul.bf16.gmra.mxu0 %v673
        %v696 = vpop.f32.mrf.mxu0
        %v697 = vadd.f32 0.0, %v696
        %v698 = vpop.f32.mrf.mxu0
        %699 = vdwg.mxu0
        %700 = vmatpush.bf16.msra.mxu0 0
        %701 = vmatpush.bf16.msra.mxu0 0
        %702 = vmatpush.bf16.msra.mxu0 0
        %703 = vmatpush.bf16.msra.mxu0 0
        %704 = vmatpush.bf16.msra.mxu0 0
        %705 = vmatpush.bf16.msra.mxu0 0
        %706 = vmatpush.bf16.msra.mxu0 0
        %707 = vmatpush.bf16.msra.mxu0 %v679
        %708 = vmatmul.bf16.gmra.mxu0 %v673
        %v709 = vpop.f32.mrf.mxu0
        %v710 = vadd.f32 0.0, %v709
        %v711 = vpop.f32.mrf.mxu0
        %712 = vdwg.mxu0
        %713 = vmatpush.bf16.msra.mxu0 0
        %714 = vmatpush.bf16.msra.mxu0 0
        %715 = vmatpush.bf16.msra.mxu0 0
        %716 = vmatpush.bf16.msra.mxu0 0
        %717 = vmatpush.bf16.msra.mxu0 0
        %718 = vmatpush.bf16.msra.mxu0 0
        %719 = vmatpush.bf16.msra.mxu0 0
        %720 = vmatpush.bf16.msra.mxu0 %v682
        %721 = vmatmul.bf16.gmra.mxu0 %v673
        %v722 = vpop.f32.mrf.mxu0
        %v723 = vadd.f32 0.0, %v722
        %v724 = vpop.f32.mrf.mxu0
        %725 = vdwg.mxu0
        %726 = vmatpush.bf16.msra.mxu0 0
        %727 = vmatpush.bf16.msra.mxu0 0
        %728 = vmatpush.bf16.msra.mxu0 0
        %729 = vmatpush.bf16.msra.mxu0 0
        %730 = vmatpush.bf16.msra.mxu0 0
        %731 = vmatpush.bf16.msra.mxu0 0
        %732 = vmatpush.bf16.msra.mxu0 0
        %733 = vmatpush.bf16.msra.mxu0 %v685
        %734 = vmatmul.bf16.gmra.mxu0 %v673
        %v735 = vpop.f32.mrf.mxu0
        %v736 = vadd.f32 0.0, %v735
        %v737 = vpop.f32.mrf.mxu0
        %738 = vdwg.mxu0
        %v739 = vadd.f32 %v651, %v697
        %v740 = vadd.f32 %v652, %v710
        %v741 = vadd.f32 %v653, %v723
        %v742 = vadd.f32 %v654, %v736
        %s743 = scalar_lea.vmem %s2, 20
        %v744 = vld [vmem:[%s743] sm:$0xf]
        %745 = vrot.lane.b32.xlu0 %v323, 116
        %v746 = vpop.permute.xlu0 %745
        %747 = vrot.lane.b32.xlu0 %v324, 116
        %v748 = vpop.permute.xlu0 %747
        %749 = vrot.lane.b32.xlu0 %v325, 116
        %v750 = vpop.permute.xlu0 %749
        %751 = vrot.lane.b32.xlu0 %v326, 116
        %v752 = vpop.permute.xlu0 %751
        %753 = vrot.lane.b32.xlu0 %v327, 116
        %v754 = vpop.permute.xlu0 %753
        %vm755 = vcmask 949248
        %v756 = vsel %vm755, %v746, %v748
        %v757 = vsel %vm755, %v748, %v750
        %v758 = vsel %vm755, %v750, %v752
        %v759 = vsel %vm755, %v752, %v754
        %v761 = vsel %vm343, %v744, 0
        %v764 = vsel %vm347, %v756, 0
        %v767 = vsel %vm347, %v757, 0
        %v770 = vsel %vm347, %v758, 0
        %v773 = vsel %vm347, %v759, 0
        %775 = vmatpush.bf16.msra.mxu0 0
        %776 = vmatpush.bf16.msra.mxu0 0
        %777 = vmatpush.bf16.msra.mxu0 0
        %778 = vmatpush.bf16.msra.mxu0 0
        %779 = vmatpush.bf16.msra.mxu0 0
        %780 = vmatpush.bf16.msra.mxu0 0
        %781 = vmatpush.bf16.msra.mxu0 0
        %782 = vmatpush.bf16.msra.mxu0 %v764
        %783 = vmatmul.bf16.gmra.mxu0 %v761
        %v784 = vpop.f32.mrf.mxu0
        %v785 = vadd.f32 0.0, %v784
        %v786 = vpop.f32.mrf.mxu0
        %787 = vdwg.mxu0
        %788 = vmatpush.bf16.msra.mxu0 0
        %789 = vmatpush.bf16.msra.mxu0 0
        %790 = vmatpush.bf16.msra.mxu0 0
        %791 = vmatpush.bf16.msra.mxu0 0
        %792 = vmatpush.bf16.msra.mxu0 0
        %793 = vmatpush.bf16.msra.mxu0 0
        %794 = vmatpush.bf16.msra.mxu0 0
        %795 = vmatpush.bf16.msra.mxu0 %v767
        %796 = vmatmul.bf16.gmra.mxu0 %v761
        %v797 = vpop.f32.mrf.mxu0
        %v798 = vadd.f32 0.0, %v797
        %v799 = vpop.f32.mrf.mxu0
        %800 = vdwg.mxu0
        %801 = vmatpush.bf16.msra.mxu0 0
        %802 = vmatpush.bf16.msra.mxu0 0
        %803 = vmatpush.bf16.msra.mxu0 0
        %804 = vmatpush.bf16.msra.mxu0 0
        %805 = vmatpush.bf16.msra.mxu0 0
        %806 = vmatpush.bf16.msra.mxu0 0
        %807 = vmatpush.bf16.msra.mxu0 0
        %808 = vmatpush.bf16.msra.mxu0 %v770
        %809 = vmatmul.bf16.gmra.mxu0 %v761
        %v810 = vpop.f32.mrf.mxu0
        %v811 = vadd.f32 0.0, %v810
        %v812 = vpop.f32.mrf.mxu0
        %813 = vdwg.mxu0
        %814 = vmatpush.bf16.msra.mxu0 0
        %815 = vmatpush.bf16.msra.mxu0 0
        %816 = vmatpush.bf16.msra.mxu0 0
        %817 = vmatpush.bf16.msra.mxu0 0
        %818 = vmatpush.bf16.msra.mxu0 0
        %819 = vmatpush.bf16.msra.mxu0 0
        %820 = vmatpush.bf16.msra.mxu0 0
        %821 = vmatpush.bf16.msra.mxu0 %v773
        %822 = vmatmul.bf16.gmra.mxu0 %v761
        %v823 = vpop.f32.mrf.mxu0
        %v824 = vadd.f32 0.0, %v823
        %v825 = vpop.f32.mrf.mxu0
        %826 = vdwg.mxu0
        %v827 = vadd.f32 %v739, %v785
        %v828 = vadd.f32 %v740, %v798
        %v829 = vadd.f32 %v741, %v811
        %v830 = vadd.f32 %v742, %v824
        %s831 = scalar_lea.vmem %s2, 24
        %v832 = vld [vmem:[%s831] sm:$0xf]
        %833 = vrot.lane.b32.xlu0 %v323, 108
        %v834 = vpop.permute.xlu0 %833
        %835 = vrot.lane.b32.xlu0 %v324, 108
        %v836 = vpop.permute.xlu0 %835
        %837 = vrot.lane.b32.xlu0 %v325, 108
        %v838 = vpop.permute.xlu0 %837
        %839 = vrot.lane.b32.xlu0 %v326, 108
        %v840 = vpop.permute.xlu0 %839
        %841 = vrot.lane.b32.xlu0 %v327, 108
        %v842 = vpop.permute.xlu0 %841
        %vm843 = vcmask 883712
        %v844 = vsel %vm843, %v834, %v836
        %v845 = vsel %vm843, %v836, %v838
        %v846 = vsel %vm843, %v838, %v840
        %v847 = vsel %vm843, %v840, %v842
        %v849 = vsel %vm343, %v832, 0
        %v852 = vsel %vm347, %v844, 0
        %v855 = vsel %vm347, %v845, 0
        %v858 = vsel %vm347, %v846, 0
        %v861 = vsel %vm347, %v847, 0
        %863 = vmatpush.bf16.msra.mxu0 0
        %864 = vmatpush.bf16.msra.mxu0 0
        %865 = vmatpush.bf16.msra.mxu0 0
        %866 = vmatpush.bf16.msra.mxu0 0
        %867 = vmatpush.bf16.msra.mxu0 0
        %868 = vmatpush.bf16.msra.mxu0 0
        %869 = vmatpush.bf16.msra.mxu0 0
        %870 = vmatpush.bf16.msra.mxu0 %v852
        %871 = vmatmul.bf16.gmra.mxu0 %v849
        %v872 = vpop.f32.mrf.mxu0
        %v873 = vadd.f32 0.0, %v872
        %v874 = vpop.f32.mrf.mxu0
        %875 = vdwg.mxu0
        %876 = vmatpush.bf16.msra.mxu0 0
        %877 = vmatpush.bf16.msra.mxu0 0
        %878 = vmatpush.bf16.msra.mxu0 0
        %879 = vmatpush.bf16.msra.mxu0 0
        %880 = vmatpush.bf16.msra.mxu0 0
        %881 = vmatpush.bf16.msra.mxu0 0
        %882 = vmatpush.bf16.msra.mxu0 0
        %883 = vmatpush.bf16.msra.mxu0 %v855
        %884 = vmatmul.bf16.gmra.mxu0 %v849
        %v885 = vpop.f32.mrf.mxu0
        %v886 = vadd.f32 0.0, %v885
        %v887 = vpop.f32.mrf.mxu0
        %888 = vdwg.mxu0
        %889 = vmatpush.bf16.msra.mxu0 0
        %890 = vmatpush.bf16.msra.mxu0 0
        %891 = vmatpush.bf16.msra.mxu0 0
        %892 = vmatpush.bf16.msra.mxu0 0
        %893 = vmatpush.bf16.msra.mxu0 0
        %894 = vmatpush.bf16.msra.mxu0 0
        %895 = vmatpush.bf16.msra.mxu0 0
        %896 = vmatpush.bf16.msra.mxu0 %v858
        %897 = vmatmul.bf16.gmra.mxu0 %v849
        %v898 = vpop.f32.mrf.mxu0
        %v899 = vadd.f32 0.0, %v898
        %v900 = vpop.f32.mrf.mxu0
        %901 = vdwg.mxu0
        %902 = vmatpush.bf16.msra.mxu0 0
        %903 = vmatpush.bf16.msra.mxu0 0
        %904 = vmatpush.bf16.msra.mxu0 0
        %905 = vmatpush.bf16.msra.mxu0 0
        %906 = vmatpush.bf16.msra.mxu0 0
        %907 = vmatpush.bf16.msra.mxu0 0
        %908 = vmatpush.bf16.msra.mxu0 0
        %909 = vmatpush.bf16.msra.mxu0 %v861
        %910 = vmatmul.bf16.gmra.mxu0 %v849
        %v911 = vpop.f32.mrf.mxu0
        %v912 = vadd.f32 0.0, %v911
        %v913 = vpop.f32.mrf.mxu0
        %914 = vdwg.mxu0
        %v915 = vadd.f32 %v827, %v873
        %v916 = vadd.f32 %v828, %v886
        %v917 = vadd.f32 %v829, %v899
        %v918 = vadd.f32 %v830, %v912
        %s919 = scalar_lea.vmem %s2, 28
        %v920 = vld [vmem:[%s919] sm:$0xf]
        %921 = vrot.lane.b32.xlu0 %v323, 107
        %v922 = vpop.permute.xlu0 %921
        %923 = vrot.lane.b32.xlu0 %v324, 107
        %v924 = vpop.permute.xlu0 %923
        %925 = vrot.lane.b32.xlu0 %v325, 107
        %v926 = vpop.permute.xlu0 %925
        %927 = vrot.lane.b32.xlu0 %v326, 107
        %v928 = vpop.permute.xlu0 %927
        %929 = vrot.lane.b32.xlu0 %v327, 107
        %v930 = vpop.permute.xlu0 %929
        %vm931 = vcmask 875520
        %v932 = vsel %vm931, %v922, %v924
        %v933 = vsel %vm931, %v924, %v926
        %v934 = vsel %vm931, %v926, %v928
        %v935 = vsel %vm931, %v928, %v930
        %v937 = vsel %vm343, %v920, 0
        %v940 = vsel %vm347, %v932, 0
        %v943 = vsel %vm347, %v933, 0
        %v946 = vsel %vm347, %v934, 0
        %v949 = vsel %vm347, %v935, 0
        %951 = vmatpush.bf16.msra.mxu0 0
        %952 = vmatpush.bf16.msra.mxu0 0
        %953 = vmatpush.bf16.msra.mxu0 0
        %954 = vmatpush.bf16.msra.mxu0 0
        %955 = vmatpush.bf16.msra.mxu0 0
        %956 = vmatpush.bf16.msra.mxu0 0
        %957 = vmatpush.bf16.msra.mxu0 0
        %958 = vmatpush.bf16.msra.mxu0 %v940
        %959 = vmatmul.bf16.gmra.mxu0 %v937
        %v960 = vpop.f32.mrf.mxu0
        %v961 = vadd.f32 0.0, %v960
        %v962 = vpop.f32.mrf.mxu0
        %963 = vdwg.mxu0
        %964 = vmatpush.bf16.msra.mxu0 0
        %965 = vmatpush.bf16.msra.mxu0 0
        %966 = vmatpush.bf16.msra.mxu0 0
        %967 = vmatpush.bf16.msra.mxu0 0
        %968 = vmatpush.bf16.msra.mxu0 0
        %969 = vmatpush.bf16.msra.mxu0 0
        %970 = vmatpush.bf16.msra.mxu0 0
        %971 = vmatpush.bf16.msra.mxu0 %v943
        %972 = vmatmul.bf16.gmra.mxu0 %v937
        %v973 = vpop.f32.mrf.mxu0
        %v974 = vadd.f32 0.0, %v973
        %v975 = vpop.f32.mrf.mxu0
        %976 = vdwg.mxu0
        %977 = vmatpush.bf16.msra.mxu0 0
        %978 = vmatpush.bf16.msra.mxu0 0
        %979 = vmatpush.bf16.msra.mxu0 0
        %980 = vmatpush.bf16.msra.mxu0 0
        %981 = vmatpush.bf16.msra.mxu0 0
        %982 = vmatpush.bf16.msra.mxu0 0
        %983 = vmatpush.bf16.msra.mxu0 0
        %984 = vmatpush.bf16.msra.mxu0 %v946
        %985 = vmatmul.bf16.gmra.mxu0 %v937
        %v986 = vpop.f32.mrf.mxu0
        %v987 = vadd.f32 0.0, %v986
        %v988 = vpop.f32.mrf.mxu0
        %989 = vdwg.mxu0
        %990 = vmatpush.bf16.msra.mxu0 0
        %991 = vmatpush.bf16.msra.mxu0 0
        %992 = vmatpush.bf16.msra.mxu0 0
        %993 = vmatpush.bf16.msra.mxu0 0
        %994 = vmatpush.bf16.msra.mxu0 0
        %995 = vmatpush.bf16.msra.mxu0 0
        %996 = vmatpush.bf16.msra.mxu0 0
        %997 = vmatpush.bf16.msra.mxu0 %v949
        %998 = vmatmul.bf16.gmra.mxu0 %v937
        %v999 = vpop.f32.mrf.mxu0
        %v1000 = vadd.f32 0.0, %v999
        %v1001 = vpop.f32.mrf.mxu0
        %1002 = vdwg.mxu0
        %v1003 = vadd.f32 %v915, %v961
        %v1004 = vadd.f32 %v916, %v974
        %v1005 = vadd.f32 %v917, %v987
        %v1006 = vadd.f32 %v918, %v1000
        %s1007 = scalar_lea.vmem %s2, 32
        %v1008 = vld [vmem:[%s1007] sm:$0xf]
        %1009 = vrot.lane.b32.xlu0 %v323, 106
        %v1010 = vpop.permute.xlu0 %1009
        %1011 = vrot.lane.b32.xlu0 %v324, 106
        %v1012 = vpop.permute.xlu0 %1011
        %1013 = vrot.lane.b32.xlu0 %v325, 106
        %v1014 = vpop.permute.xlu0 %1013
        %1015 = vrot.lane.b32.xlu0 %v326, 106
        %v1016 = vpop.permute.xlu0 %1015
        %1017 = vrot.lane.b32.xlu0 %v327, 106
        %v1018 = vpop.permute.xlu0 %1017
        %vm1019 = vcmask 867328
        %v1020 = vsel %vm1019, %v1010, %v1012
        %v1021 = vsel %vm1019, %v1012, %v1014
        %v1022 = vsel %vm1019, %v1014, %v1016
        %v1023 = vsel %vm1019, %v1016, %v1018
        %v1025 = vsel %vm343, %v1008, 0
        %v1028 = vsel %vm347, %v1020, 0
        %v1031 = vsel %vm347, %v1021, 0
        %v1034 = vsel %vm347, %v1022, 0
        %v1037 = vsel %vm347, %v1023, 0
        %1039 = vmatpush.bf16.msra.mxu0 0
        %1040 = vmatpush.bf16.msra.mxu0 0
        %1041 = vmatpush.bf16.msra.mxu0 0
        %1042 = vmatpush.bf16.msra.mxu0 0
        %1043 = vmatpush.bf16.msra.mxu0 0
        %1044 = vmatpush.bf16.msra.mxu0 0
        %1045 = vmatpush.bf16.msra.mxu0 0
        %1046 = vmatpush.bf16.msra.mxu0 %v1028
        %1047 = vmatmul.bf16.gmra.mxu0 %v1025
        %v1048 = vpop.f32.mrf.mxu0
        %v1049 = vadd.f32 0.0, %v1048
        %v1050 = vpop.f32.mrf.mxu0
        %1051 = vdwg.mxu0
        %1052 = vmatpush.bf16.msra.mxu0 0
        %1053 = vmatpush.bf16.msra.mxu0 0
        %1054 = vmatpush.bf16.msra.mxu0 0
        %1055 = vmatpush.bf16.msra.mxu0 0
        %1056 = vmatpush.bf16.msra.mxu0 0
        %1057 = vmatpush.bf16.msra.mxu0 0
        %1058 = vmatpush.bf16.msra.mxu0 0
        %1059 = vmatpush.bf16.msra.mxu0 %v1031
        %1060 = vmatmul.bf16.gmra.mxu0 %v1025
        %v1061 = vpop.f32.mrf.mxu0
        %v1062 = vadd.f32 0.0, %v1061
        %v1063 = vpop.f32.mrf.mxu0
        %1064 = vdwg.mxu0
        %1065 = vmatpush.bf16.msra.mxu0 0
        %1066 = vmatpush.bf16.msra.mxu0 0
        %1067 = vmatpush.bf16.msra.mxu0 0
        %1068 = vmatpush.bf16.msra.mxu0 0
        %1069 = vmatpush.bf16.msra.mxu0 0
        %1070 = vmatpush.bf16.msra.mxu0 0
        %1071 = vmatpush.bf16.msra.mxu0 0
        %1072 = vmatpush.bf16.msra.mxu0 %v1034
        %1073 = vmatmul.bf16.gmra.mxu0 %v1025
        %v1074 = vpop.f32.mrf.mxu0
        %v1075 = vadd.f32 0.0, %v1074
        %v1076 = vpop.f32.mrf.mxu0
        %1077 = vdwg.mxu0
        %1078 = vmatpush.bf16.msra.mxu0 0
        %1079 = vmatpush.bf16.msra.mxu0 0
        %1080 = vmatpush.bf16.msra.mxu0 0
        %1081 = vmatpush.bf16.msra.mxu0 0
        %1082 = vmatpush.bf16.msra.mxu0 0
        %1083 = vmatpush.bf16.msra.mxu0 0
        %1084 = vmatpush.bf16.msra.mxu0 0
        %1085 = vmatpush.bf16.msra.mxu0 %v1037
        %1086 = vmatmul.bf16.gmra.mxu0 %v1025
        %v1087 = vpop.f32.mrf.mxu0
        %v1088 = vadd.f32 0.0, %v1087
        %v1089 = vpop.f32.mrf.mxu0
        %1090 = vdwg.mxu0
        %v1091 = vadd.f32 %v1003, %v1049
        %v1092 = vadd.f32 %v1004, %v1062
        %v1093 = vadd.f32 %v1005, %v1075
        %v1094 = vadd.f32 %v1006, %v1088
        %v1095 = vld [vmem:[%s3] sm:$0xff]
        %1097 = vset.pattern.permute.xlu0 0
        %1098 = vperm.xlu0 %1097, %v1095
        %v1099 = vpop.permute.xlu0 %1098
        %v1101 = vadd.f32 %v1091, %v1099
        %v1102 = vadd.f32 %v1092, %v1099
        %v1103 = vadd.f32 %v1093, %v1099
        %v1104 = vadd.f32 %v1094, %v1099
        %v1106 = vperm.slane %v307, 0
        %v1107 = vperm.slane %v307, 1
        %v1108 = vperm.slane %v307, 2
        %v1109 = vperm.slane %v307, 3
        %v1114 = vmul.f32 %v1101, %v1106
        %v1115 = vmul.f32 %v1102, %v1107
        %v1116 = vmul.f32 %v1103, %v1108
        %v1117 = vmul.f32 %v1104, %v1109
        %v1118 = vadd.f32 %v1114, %v1115
        %v1119 = vadd.f32 %v1118, %v1116
        %v1120 = vadd.f32 %v1119, %v1117
        %1121 = vadd.xlane.f32.xlu0 %v1120
        %v1122 = vpop.xlane.xlu0 %1121
        %v1123 = vmul.f32 %v1122, 0.00390625
        %v1124 = vmul.f32 %v1114, %v1101
        %v1125 = vmul.f32 %v1115, %v1102
        %v1126 = vmul.f32 %v1116, %v1103
        %v1127 = vmul.f32 %v1117, %v1104
        %v1128 = vadd.f32 %v1124, %v1125
        %v1129 = vadd.f32 %v1128, %v1126
        %v1130 = vadd.f32 %v1129, %v1127
        %1131 = vadd.xlane.f32.xlu0 %v1130
        %v1132 = vpop.xlane.xlu0 %1131
        %v1133 = vmul.f32 %v1132, 0.00390625
        %v1134 = vmul.f32 %v1123, %v1123
        %v1135 = vsub.f32 %v1133, %v1134
        %v1136 = vsub.f32 %v1101, %v1123
        %v1137 = vsub.f32 %v1102, %v1123
        %v1138 = vsub.f32 %v1103, %v1123
        %v1139 = vsub.f32 %v1104, %v1123
        %v1140 = vadd.f32 %v1135, 1e-05
        %v1141 = vrsqrt.pop %v1140
        %v1142 = vmul.f32 %v1141, %v1140
        %v1143 = vmul.f32 %v1142, %v1141
        %v1144 = vmul.f32 0.5, %v1143
        %v1145 = vsub.f32 1.5, %v1144
        %v1146 = vmul.f32 %v1141, %v1145
        %vm1147 = vweird.f32 %v1140
        %vm1148 = vweird.f32 %v1141
        %vm1149 = vmor %vm1147, %vm1148
        %v1150 = vsel %vm1149, %v1141, %v1146
        %v1151 = vmul.f32 %v1136, %v1150
        %v1152 = vmul.f32 %v1137, %v1150
        %v1153 = vmul.f32 %v1138, %v1150
        %v1154 = vmul.f32 %v1139, %v1150
        %vm1155 = vcmp.ge.f32.partialorder %v1151, 0.0
        %vm1156 = vcmp.ge.f32.partialorder %v1152, 0.0
        %vm1157 = vcmp.ge.f32.partialorder %v1153, 0.0
        %vm1158 = vcmp.ge.f32.partialorder %v1154, 0.0
        %v1159 = vstv %s308
        %v1160 = vmul.f32 %v1159, %v1151
        %v1161 = vmul.f32 %v1159, %v1152
        %v1162 = vmul.f32 %v1159, %v1153
        %v1163 = vmul.f32 %v1159, %v1154
        %v1164 = vsel %vm1155, %v1151, %v1160
        %v1165 = vsel %vm1156, %v1152, %v1161
        %v1166 = vsel %vm1157, %v1153, %v1162
        %v1167 = vsel %vm1158, %v1154, %v1163
        %v1168 = vmul.f32 %v1164, %v1106
        %v1169 = vmul.f32 %v1165, %v1107
        %v1170 = vmul.f32 %v1166, %v1108
        %v1171 = vmul.f32 %v1167, %v1109
        %1172 = vst [vmem:[#allocation2] sm:$0xff] 0
        %1173 = vst [vmem:[#allocation2 + $0x8] sm:$0xff] 0
        %vm1174 = vcmask 175104
        %1175 = vst.msk [vmem:[#allocation2 + $0x10] sm:$0xf] %vm1174, 0
        %v1176 = vpack.c.bf16 %v1169, %v1168
        %v1177 = vpack.c.bf16 %v1171, %v1170
        %1180 = vrot.lane.b32.xlu0 %v1176, 11
        %v1181 = vpop.permute.xlu0 %1180
        %1182 = vrot.lane.b32.xlu0 %v1177, 11
        %v1183 = vpop.permute.xlu0 %1182
        %v1184 = vrot.slane %v1181, 4
        %v1185 = vrot.slane %v1183, 4
        %vm1186 = vcmask 89088
        %v1187 = vsel %vm1186, %v1184, %v1181
        %vm1188 = vcmask 1043456
        %v1189 = vsel %vm1188, %v1184, %v1185
        %v1190 = vsel %vm1186, %v1189, %v1183
        %vm1194 = vcmask 1043544
        %vm1195 = vcmask 1047556
        %vm1196 = vmor %vm1195, %vm1194
        %1197 = vst.msk [vmem:[#allocation2] sm:$0xff] %vm1196, %v1187
        %1198 = vst [vmem:[#allocation2 + $0x8] sm:$0xff] %v1190
        %vm1199 = vcmask 84992
        %1200 = vst.msk [vmem:[#allocation2 + $0x10] sm:$0xf] %vm1199, %v1185
        %s1201 = sld [smem:[#allocation4]]
        %v1202 = vld [vmem:[%s5] sm:$0xf]
        %v1203 = vld [vmem:[#allocation2] sm:$0xff]
        %v1204 = vld [vmem:[#allocation2 + $0x8] sm:$0xff]
        %s1205 = scalar_lea.vmem %s5, 4
        %v1206 = vld [vmem:[%s1205] sm:$0xf]
        %v1207 = vld [vmem:[#allocation2 + $0x10] sm:$0xf]
        %v1211 = vunpack.c.l.b16 %v1203
        %v1212 = vunpack.c.h.b16 %v1203
        %v1213 = vunpack.c.l.b16 %v1204
        %v1214 = vunpack.c.h.b16 %v1204
        %v1215 = vunpack.c.l.b16 %v1207
        %v1216 = vpack.c.b16 %v1211, %v1211
        %v1217 = vpack.c.b16 %v1212, %v1212
        %v1218 = vpack.c.b16 %v1213, %v1213
        %v1219 = vpack.c.b16 %v1214, %v1214
        %v1220 = vpack.c.b16 %v1215, %v1215
        %1221 = vrot.lane.b32.xlu0 %v1216, 127
        %v1222 = vpop.permute.xlu0 %1221
        %1223 = vrot.lane.b32.xlu0 %v1217, 127
        %v1224 = vpop.permute.xlu0 %1223
        %1225 = vrot.lane.b32.xlu0 %v1218, 127
        %v1226 = vpop.permute.xlu0 %1225
        %1227 = vrot.lane.b32.xlu0 %v1219, 127
        %v1228 = vpop.permute.xlu0 %1227
        %1229 = vrot.lane.b32.xlu0 %v1220, 127
        %v1230 = vpop.permute.xlu0 %1229
        %v1231 = vsel %vm338, %v1222, %v1224
        %v1232 = vsel %vm338, %v1224, %v1226
        %v1233 = vsel %vm338, %v1226, %v1228
        %v1234 = vsel %vm338, %v1228, %v1230
        %v1236 = vsel %vm343, %v1206, 0
        %v1239 = vsel %vm347, %v1231, 0
        %v1242 = vsel %vm347, %v1232, 0
        %v1245 = vsel %vm347, %v1233, 0
        %v1248 = vsel %vm347, %v1234, 0
        %1250 = vmatpush.bf16.msra.mxu0 0
        %1251 = vmatpush.bf16.msra.mxu0 0
        %1252 = vmatpush.bf16.msra.mxu0 0
        %1253 = vmatpush.bf16.msra.mxu0 0
        %1254 = vmatpush.bf16.msra.mxu0 0
        %1255 = vmatpush.bf16.msra.mxu0 0
        %1256 = vmatpush.bf16.msra.mxu0 0
        %1257 = vmatpush.bf16.msra.mxu0 %v1239
        %1258 = vmatmul.bf16.gmra.mxu0 %v1236
        %v1259 = vpop.f32.mrf.mxu0
        %v1260 = vadd.f32 0.0, %v1259
        %v1261 = vpop.f32.mrf.mxu0
        %1262 = vdwg.mxu0
        %1263 = vmatpush.bf16.msra.mxu0 0
        %1264 = vmatpush.bf16.msra.mxu0 0
        %1265 = vmatpush.bf16.msra.mxu0 0
        %1266 = vmatpush.bf16.msra.mxu0 0
        %1267 = vmatpush.bf16.msra.mxu0 0
        %1268 = vmatpush.bf16.msra.mxu0 0
        %1269 = vmatpush.bf16.msra.mxu0 0
        %1270 = vmatpush.bf16.msra.mxu0 %v1242
        %1271 = vmatmul.bf16.gmra.mxu0 %v1236
        %v1272 = vpop.f32.mrf.mxu0
        %v1273 = vadd.f32 0.0, %v1272
        %v1274 = vpop.f32.mrf.mxu0
        %1275 = vdwg.mxu0
        %1276 = vmatpush.bf16.msra.mxu0 0
        %1277 = vmatpush.bf16.msra.mxu0 0
        %1278 = vmatpush.bf16.msra.mxu0 0
        %1279 = vmatpush.bf16.msra.mxu0 0
        %1280 = vmatpush.bf16.msra.mxu0 0
        %1281 = vmatpush.bf16.msra.mxu0 0
        %1282 = vmatpush.bf16.msra.mxu0 0
        %1283 = vmatpush.bf16.msra.mxu0 %v1245
        %1284 = vmatmul.bf16.gmra.mxu0 %v1236
        %v1285 = vpop.f32.mrf.mxu0
        %v1286 = vadd.f32 0.0, %v1285
        %v1287 = vpop.f32.mrf.mxu0
        %1288 = vdwg.mxu0
        %1289 = vmatpush.bf16.msra.mxu0 0
        %1290 = vmatpush.bf16.msra.mxu0 0
        %1291 = vmatpush.bf16.msra.mxu0 0
        %1292 = vmatpush.bf16.msra.mxu0 0
        %1293 = vmatpush.bf16.msra.mxu0 0
        %1294 = vmatpush.bf16.msra.mxu0 0
        %1295 = vmatpush.bf16.msra.mxu0 0
        %1296 = vmatpush.bf16.msra.mxu0 %v1248
        %1297 = vmatmul.bf16.gmra.mxu0 %v1236
        %v1298 = vpop.f32.mrf.mxu0
        %v1299 = vadd.f32 0.0, %v1298
        %v1300 = vpop.f32.mrf.mxu0
        %1301 = vdwg.mxu0
        %v1303 = vsel %vm343, %v1202, 0
        %v1306 = vsel %vm347, %v1216, 0
        %v1309 = vsel %vm347, %v1217, 0
        %v1312 = vsel %vm347, %v1218, 0
        %v1315 = vsel %vm347, %v1219, 0
        %1317 = vmatpush.bf16.msra.mxu0 0
        %1318 = vmatpush.bf16.msra.mxu0 0
        %1319 = vmatpush.bf16.msra.mxu0 0
        %1320 = vmatpush.bf16.msra.mxu0 0
        %1321 = vmatpush.bf16.msra.mxu0 0
        %1322 = vmatpush.bf16.msra.mxu0 0
        %1323 = vmatpush.bf16.msra.mxu0 0
        %1324 = vmatpush.bf16.msra.mxu0 %v1306
        %1325 = vmatmul.bf16.gmra.mxu0 %v1303
        %v1326 = vpop.f32.mrf.mxu0
        %v1327 = vadd.f32 %v1260, %v1326
        %v1328 = vpop.f32.mrf.mxu0
        %1329 = vdwg.mxu0
        %1330 = vmatpush.bf16.msra.mxu0 0
        %1331 = vmatpush.bf16.msra.mxu0 0
        %1332 = vmatpush.bf16.msra.mxu0 0
        %1333 = vmatpush.bf16.msra.mxu0 0
        %1334 = vmatpush.bf16.msra.mxu0 0
        %1335 = vmatpush.bf16.msra.mxu0 0
        %1336 = vmatpush.bf16.msra.mxu0 0
        %1337 = vmatpush.bf16.msra.mxu0 %v1309
        %1338 = vmatmul.bf16.gmra.mxu0 %v1303
        %v1339 = vpop.f32.mrf.mxu0
        %v1340 = vadd.f32 %v1273, %v1339
        %v1341 = vpop.f32.mrf.mxu0
        %1342 = vdwg.mxu0
        %1343 = vmatpush.bf16.msra.mxu0 0
        %1344 = vmatpush.bf16.msra.mxu0 0
        %1345 = vmatpush.bf16.msra.mxu0 0
        %1346 = vmatpush.bf16.msra.mxu0 0
        %1347 = vmatpush.bf16.msra.mxu0 0
        %1348 = vmatpush.bf16.msra.mxu0 0
        %1349 = vmatpush.bf16.msra.mxu0 0
        %1350 = vmatpush.bf16.msra.mxu0 %v1312
        %1351 = vmatmul.bf16.gmra.mxu0 %v1303
        %v1352 = vpop.f32.mrf.mxu0
        %v1353 = vadd.f32 %v1286, %v1352
        %v1354 = vpop.f32.mrf.mxu0
        %1355 = vdwg.mxu0
        %1356 = vmatpush.bf16.msra.mxu0 0
        %1357 = vmatpush.bf16.msra.mxu0 0
        %1358 = vmatpush.bf16.msra.mxu0 0
        %1359 = vmatpush.bf16.msra.mxu0 0
        %1360 = vmatpush.bf16.msra.mxu0 0
        %1361 = vmatpush.bf16.msra.mxu0 0
        %1362 = vmatpush.bf16.msra.mxu0 0
        %1363 = vmatpush.bf16.msra.mxu0 %v1315
        %1364 = vmatmul.bf16.gmra.mxu0 %v1303
        %v1365 = vpop.f32.mrf.mxu0
        %v1366 = vadd.f32 %v1299, %v1365
        %v1367 = vpop.f32.mrf.mxu0
        %1368 = vdwg.mxu0
        %s1369 = scalar_lea.vmem %s5, 8
        %v1370 = vld [vmem:[%s1369] sm:$0xf]
        %1371 = vrot.lane.b32.xlu0 %v1216, 126
        %v1372 = vpop.permute.xlu0 %1371
        %1373 = vrot.lane.b32.xlu0 %v1217, 126
        %v1374 = vpop.permute.xlu0 %1373
        %1375 = vrot.lane.b32.xlu0 %v1218, 126
        %v1376 = vpop.permute.xlu0 %1375
        %1377 = vrot.lane.b32.xlu0 %v1219, 126
        %v1378 = vpop.permute.xlu0 %1377
        %1379 = vrot.lane.b32.xlu0 %v1220, 126
        %v1380 = vpop.permute.xlu0 %1379
        %v1381 = vsel %vm491, %v1372, %v1374
        %v1382 = vsel %vm491, %v1374, %v1376
        %v1383 = vsel %vm491, %v1376, %v1378
        %v1384 = vsel %vm491, %v1378, %v1380
        %v1386 = vsel %vm343, %v1370, 0
        %v1389 = vsel %vm347, %v1381, 0
        %v1392 = vsel %vm347, %v1382, 0
        %v1395 = vsel %vm347, %v1383, 0
        %v1398 = vsel %vm347, %v1384, 0
        %1400 = vmatpush.bf16.msra.mxu0 0
        %1401 = vmatpush.bf16.msra.mxu0 0
        %1402 = vmatpush.bf16.msra.mxu0 0
        %1403 = vmatpush.bf16.msra.mxu0 0
        %1404 = vmatpush.bf16.msra.mxu0 0
        %1405 = vmatpush.bf16.msra.mxu0 0
        %1406 = vmatpush.bf16.msra.mxu0 0
        %1407 = vmatpush.bf16.msra.mxu0 %v1389
        %1408 = vmatmul.bf16.gmra.mxu0 %v1386
        %v1409 = vpop.f32.mrf.mxu0
        %v1410 = vadd.f32 0.0, %v1409
        %v1411 = vpop.f32.mrf.mxu0
        %1412 = vdwg.mxu0
        %1413 = vmatpush.bf16.msra.mxu0 0
        %1414 = vmatpush.bf16.msra.mxu0 0
        %1415 = vmatpush.bf16.msra.mxu0 0
        %1416 = vmatpush.bf16.msra.mxu0 0
        %1417 = vmatpush.bf16.msra.mxu0 0
        %1418 = vmatpush.bf16.msra.mxu0 0
        %1419 = vmatpush.bf16.msra.mxu0 0
        %1420 = vmatpush.bf16.msra.mxu0 %v1392
        %1421 = vmatmul.bf16.gmra.mxu0 %v1386
        %v1422 = vpop.f32.mrf.mxu0
        %v1423 = vadd.f32 0.0, %v1422
        %v1424 = vpop.f32.mrf.mxu0
        %1425 = vdwg.mxu0
        %1426 = vmatpush.bf16.msra.mxu0 0
        %1427 = vmatpush.bf16.msra.mxu0 0
        %1428 = vmatpush.bf16.msra.mxu0 0
        %1429 = vmatpush.bf16.msra.mxu0 0
        %1430 = vmatpush.bf16.msra.mxu0 0
        %1431 = vmatpush.bf16.msra.mxu0 0
        %1432 = vmatpush.bf16.msra.mxu0 0
        %1433 = vmatpush.bf16.msra.mxu0 %v1395
        %1434 = vmatmul.bf16.gmra.mxu0 %v1386
        %v1435 = vpop.f32.mrf.mxu0
        %v1436 = vadd.f32 0.0, %v1435
        %v1437 = vpop.f32.mrf.mxu0
        %1438 = vdwg.mxu0
        %1439 = vmatpush.bf16.msra.mxu0 0
        %1440 = vmatpush.bf16.msra.mxu0 0
        %1441 = vmatpush.bf16.msra.mxu0 0
        %1442 = vmatpush.bf16.msra.mxu0 0
        %1443 = vmatpush.bf16.msra.mxu0 0
        %1444 = vmatpush.bf16.msra.mxu0 0
        %1445 = vmatpush.bf16.msra.mxu0 0
        %1446 = vmatpush.bf16.msra.mxu0 %v1398
        %1447 = vmatmul.bf16.gmra.mxu0 %v1386
        %v1448 = vpop.f32.mrf.mxu0
        %v1449 = vadd.f32 0.0, %v1448
        %v1450 = vpop.f32.mrf.mxu0
        %1451 = vdwg.mxu0
        %v1452 = vadd.f32 %v1327, %v1410
        %v1453 = vadd.f32 %v1340, %v1423
        %v1454 = vadd.f32 %v1353, %v1436
        %v1455 = vadd.f32 %v1366, %v1449
        %s1456 = scalar_lea.vmem %s5, 12
        %v1457 = vld [vmem:[%s1456] sm:$0xf]
        %1458 = vrot.lane.b32.xlu0 %v1216, 118
        %v1459 = vpop.permute.xlu0 %1458
        %1460 = vrot.lane.b32.xlu0 %v1217, 118
        %v1461 = vpop.permute.xlu0 %1460
        %1462 = vrot.lane.b32.xlu0 %v1218, 118
        %v1463 = vpop.permute.xlu0 %1462
        %1464 = vrot.lane.b32.xlu0 %v1219, 118
        %v1465 = vpop.permute.xlu0 %1464
        %1466 = vrot.lane.b32.xlu0 %v1220, 118
        %v1467 = vpop.permute.xlu0 %1466
        %v1468 = vsel %vm579, %v1459, %v1461
        %v1469 = vsel %vm579, %v1461, %v1463
        %v1470 = vsel %vm579, %v1463, %v1465
        %v1471 = vsel %vm579, %v1465, %v1467
        %v1473 = vsel %vm343, %v1457, 0
        %v1476 = vsel %vm347, %v1468, 0
        %v1479 = vsel %vm347, %v1469, 0
        %v1482 = vsel %vm347, %v1470, 0
        %v1485 = vsel %vm347, %v1471, 0
        %1487 = vmatpush.bf16.msra.mxu0 0
        %1488 = vmatpush.bf16.msra.mxu0 0
        %1489 = vmatpush.bf16.msra.mxu0 0
        %1490 = vmatpush.bf16.msra.mxu0 0
        %1491 = vmatpush.bf16.msra.mxu0 0
        %1492 = vmatpush.bf16.msra.mxu0 0
        %1493 = vmatpush.bf16.msra.mxu0 0
        %1494 = vmatpush.bf16.msra.mxu0 %v1476
        %1495 = vmatmul.bf16.gmra.mxu0 %v1473
        %v1496 = vpop.f32.mrf.mxu0
        %v1497 = vadd.f32 0.0, %v1496
        %v1498 = vpop.f32.mrf.mxu0
        %1499 = vdwg.mxu0
        %1500 = vmatpush.bf16.msra.mxu0 0
        %1501 = vmatpush.bf16.msra.mxu0 0
        %1502 = vmatpush.bf16.msra.mxu0 0
        %1503 = vmatpush.bf16.msra.mxu0 0
        %1504 = vmatpush.bf16.msra.mxu0 0
        %1505 = vmatpush.bf16.msra.mxu0 0
        %1506 = vmatpush.bf16.msra.mxu0 0
        %1507 = vmatpush.bf16.msra.mxu0 %v1479
        %1508 = vmatmul.bf16.gmra.mxu0 %v1473
        %v1509 = vpop.f32.mrf.mxu0
        %v1510 = vadd.f32 0.0, %v1509
        %v1511 = vpop.f32.mrf.mxu0
        %1512 = vdwg.mxu0
        %1513 = vmatpush.bf16.msra.mxu0 0
        %1514 = vmatpush.bf16.msra.mxu0 0
        %1515 = vmatpush.bf16.msra.mxu0 0
        %1516 = vmatpush.bf16.msra.mxu0 0
        %1517 = vmatpush.bf16.msra.mxu0 0
        %1518 = vmatpush.bf16.msra.mxu0 0
        %1519 = vmatpush.bf16.msra.mxu0 0
        %1520 = vmatpush.bf16.msra.mxu0 %v1482
        %1521 = vmatmul.bf16.gmra.mxu0 %v1473
        %v1522 = vpop.f32.mrf.mxu0
        %v1523 = vadd.f32 0.0, %v1522
        %v1524 = vpop.f32.mrf.mxu0
        %1525 = vdwg.mxu0
        %1526 = vmatpush.bf16.msra.mxu0 0
        %1527 = vmatpush.bf16.msra.mxu0 0
        %1528 = vmatpush.bf16.msra.mxu0 0
        %1529 = vmatpush.bf16.msra.mxu0 0
        %1530 = vmatpush.bf16.msra.mxu0 0
        %1531 = vmatpush.bf16.msra.mxu0 0
        %1532 = vmatpush.bf16.msra.mxu0 0
        %1533 = vmatpush.bf16.msra.mxu0 %v1485
        %1534 = vmatmul.bf16.gmra.mxu0 %v1473
        %v1535 = vpop.f32.mrf.mxu0
        %v1536 = vadd.f32 0.0, %v1535
        %v1537 = vpop.f32.mrf.mxu0
        %1538 = vdwg.mxu0
        %v1539 = vadd.f32 %v1452, %v1497
        %v1540 = vadd.f32 %v1453, %v1510
        %v1541 = vadd.f32 %v1454, %v1523
        %v1542 = vadd.f32 %v1455, %v1536
        %s1543 = scalar_lea.vmem %s5, 16
        %v1544 = vld [vmem:[%s1543] sm:$0xf]
        %1545 = vrot.lane.b32.xlu0 %v1216, 117
        %v1546 = vpop.permute.xlu0 %1545
        %1547 = vrot.lane.b32.xlu0 %v1217, 117
        %v1548 = vpop.permute.xlu0 %1547
        %1549 = vrot.lane.b32.xlu0 %v1218, 117
        %v1550 = vpop.permute.xlu0 %1549
        %1551 = vrot.lane.b32.xlu0 %v1219, 117
        %v1552 = vpop.permute.xlu0 %1551
        %1553 = vrot.lane.b32.xlu0 %v1220, 117
        %v1554 = vpop.permute.xlu0 %1553
        %v1555 = vsel %vm667, %v1546, %v1548
        %v1556 = vsel %vm667, %v1548, %v1550
        %v1557 = vsel %vm667, %v1550, %v1552
        %v1558 = vsel %vm667, %v1552, %v1554
        %v1560 = vsel %vm343, %v1544, 0
        %v1563 = vsel %vm347, %v1555, 0
        %v1566 = vsel %vm347, %v1556, 0
        %v1569 = vsel %vm347, %v1557, 0
        %v1572 = vsel %vm347, %v1558, 0
        %1574 = vmatpush.bf16.msra.mxu0 0
        %1575 = vmatpush.bf16.msra.mxu0 0
        %1576 = vmatpush.bf16.msra.mxu0 0
        %1577 = vmatpush.bf16.msra.mxu0 0
        %1578 = vmatpush.bf16.msra.mxu0 0
        %1579 = vmatpush.bf16.msra.mxu0 0
        %1580 = vmatpush.bf16.msra.mxu0 0
        %1581 = vmatpush.bf16.msra.mxu0 %v1563
        %1582 = vmatmul.bf16.gmra.mxu0 %v1560
        %v1583 = vpop.f32.mrf.mxu0
        %v1584 = vadd.f32 0.0, %v1583
        %v1585 = vpop.f32.mrf.mxu0
        %1586 = vdwg.mxu0
        %1587 = vmatpush.bf16.msra.mxu0 0
        %1588 = vmatpush.bf16.msra.mxu0 0
        %1589 = vmatpush.bf16.msra.mxu0 0
        %1590 = vmatpush.bf16.msra.mxu0 0
        %1591 = vmatpush.bf16.msra.mxu0 0
        %1592 = vmatpush.bf16.msra.mxu0 0
        %1593 = vmatpush.bf16.msra.mxu0 0
        %1594 = vmatpush.bf16.msra.mxu0 %v1566
        %1595 = vmatmul.bf16.gmra.mxu0 %v1560
        %v1596 = vpop.f32.mrf.mxu0
        %v1597 = vadd.f32 0.0, %v1596
        %v1598 = vpop.f32.mrf.mxu0
        %1599 = vdwg.mxu0
        %1600 = vmatpush.bf16.msra.mxu0 0
        %1601 = vmatpush.bf16.msra.mxu0 0
        %1602 = vmatpush.bf16.msra.mxu0 0
        %1603 = vmatpush.bf16.msra.mxu0 0
        %1604 = vmatpush.bf16.msra.mxu0 0
        %1605 = vmatpush.bf16.msra.mxu0 0
        %1606 = vmatpush.bf16.msra.mxu0 0
        %1607 = vmatpush.bf16.msra.mxu0 %v1569
        %1608 = vmatmul.bf16.gmra.mxu0 %v1560
        %v1609 = vpop.f32.mrf.mxu0
        %v1610 = vadd.f32 0.0, %v1609
        %v1611 = vpop.f32.mrf.mxu0
        %1612 = vdwg.mxu0
        %1613 = vmatpush.bf16.msra.mxu0 0
        %1614 = vmatpush.bf16.msra.mxu0 0
        %1615 = vmatpush.bf16.msra.mxu0 0
        %1616 = vmatpush.bf16.msra.mxu0 0
        %1617 = vmatpush.bf16.msra.mxu0 0
        %1618 = vmatpush.bf16.msra.mxu0 0
        %1619 = vmatpush.bf16.msra.mxu0 0
        %1620 = vmatpush.bf16.msra.mxu0 %v1572
        %1621 = vmatmul.bf16.gmra.mxu0 %v1560
        %v1622 = vpop.f32.mrf.mxu0
        %v1623 = vadd.f32 0.0, %v1622
        %v1624 = vpop.f32.mrf.mxu0
        %1625 = vdwg.mxu0
        %v1626 = vadd.f32 %v1539, %v1584
        %v1627 = vadd.f32 %v1540, %v1597
        %v1628 = vadd.f32 %v1541, %v1610
        %v1629 = vadd.f32 %v1542, %v1623
        %s1630 = scalar_lea.vmem %s5, 20
        %v1631 = vld [vmem:[%s1630] sm:$0xf]
        %1632 = vrot.lane.b32.xlu0 %v1216, 116
        %v1633 = vpop.permute.xlu0 %1632
        %1634 = vrot.lane.b32.xlu0 %v1217, 116
        %v1635 = vpop.permute.xlu0 %1634
        %1636 = vrot.lane.b32.xlu0 %v1218, 116
        %v1637 = vpop.permute.xlu0 %1636
        %1638 = vrot.lane.b32.xlu0 %v1219, 116
        %v1639 = vpop.permute.xlu0 %1638
        %1640 = vrot.lane.b32.xlu0 %v1220, 116
        %v1641 = vpop.permute.xlu0 %1640
        %v1642 = vsel %vm755, %v1633, %v1635
        %v1643 = vsel %vm755, %v1635, %v1637
        %v1644 = vsel %vm755, %v1637, %v1639
        %v1645 = vsel %vm755, %v1639, %v1641
        %v1647 = vsel %vm343, %v1631, 0
        %v1650 = vsel %vm347, %v1642, 0
        %v1653 = vsel %vm347, %v1643, 0
        %v1656 = vsel %vm347, %v1644, 0
        %v1659 = vsel %vm347, %v1645, 0
        %1661 = vmatpush.bf16.msra.mxu0 0
        %1662 = vmatpush.bf16.msra.mxu0 0
        %1663 = vmatpush.bf16.msra.mxu0 0
        %1664 = vmatpush.bf16.msra.mxu0 0
        %1665 = vmatpush.bf16.msra.mxu0 0
        %1666 = vmatpush.bf16.msra.mxu0 0
        %1667 = vmatpush.bf16.msra.mxu0 0
        %1668 = vmatpush.bf16.msra.mxu0 %v1650
        %1669 = vmatmul.bf16.gmra.mxu0 %v1647
        %v1670 = vpop.f32.mrf.mxu0
        %v1671 = vadd.f32 0.0, %v1670
        %v1672 = vpop.f32.mrf.mxu0
        %1673 = vdwg.mxu0
        %1674 = vmatpush.bf16.msra.mxu0 0
        %1675 = vmatpush.bf16.msra.mxu0 0
        %1676 = vmatpush.bf16.msra.mxu0 0
        %1677 = vmatpush.bf16.msra.mxu0 0
        %1678 = vmatpush.bf16.msra.mxu0 0
        %1679 = vmatpush.bf16.msra.mxu0 0
        %1680 = vmatpush.bf16.msra.mxu0 0
        %1681 = vmatpush.bf16.msra.mxu0 %v1653
        %1682 = vmatmul.bf16.gmra.mxu0 %v1647
        %v1683 = vpop.f32.mrf.mxu0
        %v1684 = vadd.f32 0.0, %v1683
        %v1685 = vpop.f32.mrf.mxu0
        %1686 = vdwg.mxu0
        %1687 = vmatpush.bf16.msra.mxu0 0
        %1688 = vmatpush.bf16.msra.mxu0 0
        %1689 = vmatpush.bf16.msra.mxu0 0
        %1690 = vmatpush.bf16.msra.mxu0 0
        %1691 = vmatpush.bf16.msra.mxu0 0
        %1692 = vmatpush.bf16.msra.mxu0 0
        %1693 = vmatpush.bf16.msra.mxu0 0
        %1694 = vmatpush.bf16.msra.mxu0 %v1656
        %1695 = vmatmul.bf16.gmra.mxu0 %v1647
        %v1696 = vpop.f32.mrf.mxu0
        %v1697 = vadd.f32 0.0, %v1696
        %v1698 = vpop.f32.mrf.mxu0
        %1699 = vdwg.mxu0
        %1700 = vmatpush.bf16.msra.mxu0 0
        %1701 = vmatpush.bf16.msra.mxu0 0
        %1702 = vmatpush.bf16.msra.mxu0 0
        %1703 = vmatpush.bf16.msra.mxu0 0
        %1704 = vmatpush.bf16.msra.mxu0 0
        %1705 = vmatpush.bf16.msra.mxu0 0
        %1706 = vmatpush.bf16.msra.mxu0 0
        %1707 = vmatpush.bf16.msra.mxu0 %v1659
        %1708 = vmatmul.bf16.gmra.mxu0 %v1647
        %v1709 = vpop.f32.mrf.mxu0
        %v1710 = vadd.f32 0.0, %v1709
        %v1711 = vpop.f32.mrf.mxu0
        %1712 = vdwg.mxu0
        %v1713 = vadd.f32 %v1626, %v1671
        %v1714 = vadd.f32 %v1627, %v1684
        %v1715 = vadd.f32 %v1628, %v1697
        %v1716 = vadd.f32 %v1629, %v1710
        %s1717 = scalar_lea.vmem %s5, 24
        %v1718 = vld [vmem:[%s1717] sm:$0xf]
        %1719 = vrot.lane.b32.xlu0 %v1216, 108
        %v1720 = vpop.permute.xlu0 %1719
        %1721 = vrot.lane.b32.xlu0 %v1217, 108
        %v1722 = vpop.permute.xlu0 %1721
        %1723 = vrot.lane.b32.xlu0 %v1218, 108
        %v1724 = vpop.permute.xlu0 %1723
        %1725 = vrot.lane.b32.xlu0 %v1219, 108
        %v1726 = vpop.permute.xlu0 %1725
        %1727 = vrot.lane.b32.xlu0 %v1220, 108
        %v1728 = vpop.permute.xlu0 %1727
        %v1729 = vsel %vm843, %v1720, %v1722
        %v1730 = vsel %vm843, %v1722, %v1724
        %v1731 = vsel %vm843, %v1724, %v1726
        %v1732 = vsel %vm843, %v1726, %v1728
        %v1734 = vsel %vm343, %v1718, 0
        %v1737 = vsel %vm347, %v1729, 0
        %v1740 = vsel %vm347, %v1730, 0
        %v1743 = vsel %vm347, %v1731, 0
        %v1746 = vsel %vm347, %v1732, 0
        %1748 = vmatpush.bf16.msra.mxu0 0
        %1749 = vmatpush.bf16.msra.mxu0 0
        %1750 = vmatpush.bf16.msra.mxu0 0
        %1751 = vmatpush.bf16.msra.mxu0 0
        %1752 = vmatpush.bf16.msra.mxu0 0
        %1753 = vmatpush.bf16.msra.mxu0 0
        %1754 = vmatpush.bf16.msra.mxu0 0
        %1755 = vmatpush.bf16.msra.mxu0 %v1737
        %1756 = vmatmul.bf16.gmra.mxu0 %v1734
        %v1757 = vpop.f32.mrf.mxu0
        %v1758 = vadd.f32 0.0, %v1757
        %v1759 = vpop.f32.mrf.mxu0
        %1760 = vdwg.mxu0
        %1761 = vmatpush.bf16.msra.mxu0 0
        %1762 = vmatpush.bf16.msra.mxu0 0
        %1763 = vmatpush.bf16.msra.mxu0 0
        %1764 = vmatpush.bf16.msra.mxu0 0
        %1765 = vmatpush.bf16.msra.mxu0 0
        %1766 = vmatpush.bf16.msra.mxu0 0
        %1767 = vmatpush.bf16.msra.mxu0 0
        %1768 = vmatpush.bf16.msra.mxu0 %v1740
        %1769 = vmatmul.bf16.gmra.mxu0 %v1734
        %v1770 = vpop.f32.mrf.mxu0
        %v1771 = vadd.f32 0.0, %v1770
        %v1772 = vpop.f32.mrf.mxu0
        %1773 = vdwg.mxu0
        %1774 = vmatpush.bf16.msra.mxu0 0
        %1775 = vmatpush.bf16.msra.mxu0 0
        %1776 = vmatpush.bf16.msra.mxu0 0
        %1777 = vmatpush.bf16.msra.mxu0 0
        %1778 = vmatpush.bf16.msra.mxu0 0
        %1779 = vmatpush.bf16.msra.mxu0 0
        %1780 = vmatpush.bf16.msra.mxu0 0
        %1781 = vmatpush.bf16.msra.mxu0 %v1743
        %1782 = vmatmul.bf16.gmra.mxu0 %v1734
        %v1783 = vpop.f32.mrf.mxu0
        %v1784 = vadd.f32 0.0, %v1783
        %v1785 = vpop.f32.mrf.mxu0
        %1786 = vdwg.mxu0
        %1787 = vmatpush.bf16.msra.mxu0 0
        %1788 = vmatpush.bf16.msra.mxu0 0
        %1789 = vmatpush.bf16.msra.mxu0 0
        %1790 = vmatpush.bf16.msra.mxu0 0
        %1791 = vmatpush.bf16.msra.mxu0 0
        %1792 = vmatpush.bf16.msra.mxu0 0
        %1793 = vmatpush.bf16.msra.mxu0 0
        %1794 = vmatpush.bf16.msra.mxu0 %v1746
        %1795 = vmatmul.bf16.gmra.mxu0 %v1734
        %v1796 = vpop.f32.mrf.mxu0
        %v1797 = vadd.f32 0.0, %v1796
        %v1798 = vpop.f32.mrf.mxu0
        %1799 = vdwg.mxu0
        %v1800 = vadd.f32 %v1713, %v1758
        %v1801 = vadd.f32 %v1714, %v1771
        %v1802 = vadd.f32 %v1715, %v1784
        %v1803 = vadd.f32 %v1716, %v1797
        %s1804 = scalar_lea.vmem %s5, 28
        %v1805 = vld [vmem:[%s1804] sm:$0xf]
        %1806 = vrot.lane.b32.xlu0 %v1216, 107
        %v1807 = vpop.permute.xlu0 %1806
        %1808 = vrot.lane.b32.xlu0 %v1217, 107
        %v1809 = vpop.permute.xlu0 %1808
        %1810 = vrot.lane.b32.xlu0 %v1218, 107
        %v1811 = vpop.permute.xlu0 %1810
        %1812 = vrot.lane.b32.xlu0 %v1219, 107
        %v1813 = vpop.permute.xlu0 %1812
        %1814 = vrot.lane.b32.xlu0 %v1220, 107
        %v1815 = vpop.permute.xlu0 %1814
        %v1816 = vsel %vm931, %v1807, %v1809
        %v1817 = vsel %vm931, %v1809, %v1811
        %v1818 = vsel %vm931, %v1811, %v1813
        %v1819 = vsel %vm931, %v1813, %v1815
        %v1821 = vsel %vm343, %v1805, 0
        %v1824 = vsel %vm347, %v1816, 0
        %v1827 = vsel %vm347, %v1817, 0
        %v1830 = vsel %vm347, %v1818, 0
        %v1833 = vsel %vm347, %v1819, 0
        %1835 = vmatpush.bf16.msra.mxu0 0
        %1836 = vmatpush.bf16.msra.mxu0 0
        %1837 = vmatpush.bf16.msra.mxu0 0
        %1838 = vmatpush.bf16.msra.mxu0 0
        %1839 = vmatpush.bf16.msra.mxu0 0
        %1840 = vmatpush.bf16.msra.mxu0 0
        %1841 = vmatpush.bf16.msra.mxu0 0
        %1842 = vmatpush.bf16.msra.mxu0 %v1824
        %1843 = vmatmul.bf16.gmra.mxu0 %v1821
        %v1844 = vpop.f32.mrf.mxu0
        %v1845 = vadd.f32 0.0, %v1844
        %v1846 = vpop.f32.mrf.mxu0
        %1847 = vdwg.mxu0
        %1848 = vmatpush.bf16.msra.mxu0 0
        %1849 = vmatpush.bf16.msra.mxu0 0
        %1850 = vmatpush.bf16.msra.mxu0 0
        %1851 = vmatpush.bf16.msra.mxu0 0
        %1852 = vmatpush.bf16.msra.mxu0 0
        %1853 = vmatpush.bf16.msra.mxu0 0
        %1854 = vmatpush.bf16.msra.mxu0 0
        %1855 = vmatpush.bf16.msra.mxu0 %v1827
        %1856 = vmatmul.bf16.gmra.mxu0 %v1821
        %v1857 = vpop.f32.mrf.mxu0
        %v1858 = vadd.f32 0.0, %v1857
        %v1859 = vpop.f32.mrf.mxu0
        %1860 = vdwg.mxu0
        %1861 = vmatpush.bf16.msra.mxu0 0
        %1862 = vmatpush.bf16.msra.mxu0 0
        %1863 = vmatpush.bf16.msra.mxu0 0
        %1864 = vmatpush.bf16.msra.mxu0 0
        %1865 = vmatpush.bf16.msra.mxu0 0
        %1866 = vmatpush.bf16.msra.mxu0 0
        %1867 = vmatpush.bf16.msra.mxu0 0
        %1868 = vmatpush.bf16.msra.mxu0 %v1830
        %1869 = vmatmul.bf16.gmra.mxu0 %v1821
        %v1870 = vpop.f32.mrf.mxu0
        %v1871 = vadd.f32 0.0, %v1870
        %v1872 = vpop.f32.mrf.mxu0
        %1873 = vdwg.mxu0
        %1874 = vmatpush.bf16.msra.mxu0 0
        %1875 = vmatpush.bf16.msra.mxu0 0
        %1876 = vmatpush.bf16.msra.mxu0 0
        %1877 = vmatpush.bf16.msra.mxu0 0
        %1878 = vmatpush.bf16.msra.mxu0 0
        %1879 = vmatpush.bf16.msra.mxu0 0
        %1880 = vmatpush.bf16.msra.mxu0 0
        %1881 = vmatpush.bf16.msra.mxu0 %v1833
        %1882 = vmatmul.bf16.gmra.mxu0 %v1821
        %v1883 = vpop.f32.mrf.mxu0
        %v1884 = vadd.f32 0.0, %v1883
        %v1885 = vpop.f32.mrf.mxu0
        %1886 = vdwg.mxu0
        %v1887 = vadd.f32 %v1800, %v1845
        %v1888 = vadd.f32 %v1801, %v1858
        %v1889 = vadd.f32 %v1802, %v1871
        %v1890 = vadd.f32 %v1803, %v1884
        %s1891 = scalar_lea.vmem %s5, 32
        %v1892 = vld [vmem:[%s1891] sm:$0xf]
        %1893 = vrot.lane.b32.xlu0 %v1216, 106
        %v1894 = vpop.permute.xlu0 %1893
        %1895 = vrot.lane.b32.xlu0 %v1217, 106
        %v1896 = vpop.permute.xlu0 %1895
        %1897 = vrot.lane.b32.xlu0 %v1218, 106
        %v1898 = vpop.permute.xlu0 %1897
        %1899 = vrot.lane.b32.xlu0 %v1219, 106
        %v1900 = vpop.permute.xlu0 %1899
        %1901 = vrot.lane.b32.xlu0 %v1220, 106
        %v1902 = vpop.permute.xlu0 %1901
        %v1903 = vsel %vm1019, %v1894, %v1896
        %v1904 = vsel %vm1019, %v1896, %v1898
        %v1905 = vsel %vm1019, %v1898, %v1900
        %v1906 = vsel %vm1019, %v1900, %v1902
        %v1908 = vsel %vm343, %v1892, 0
        %v1911 = vsel %vm347, %v1903, 0
        %v1914 = vsel %vm347, %v1904, 0
        %v1917 = vsel %vm347, %v1905, 0
        %v1920 = vsel %vm347, %v1906, 0
        %1922 = vmatpush.bf16.msra.mxu0 0
        %1923 = vmatpush.bf16.msra.mxu0 0
        %1924 = vmatpush.bf16.msra.mxu0 0
        %1925 = vmatpush.bf16.msra.mxu0 0
        %1926 = vmatpush.bf16.msra.mxu0 0
        %1927 = vmatpush.bf16.msra.mxu0 0
        %1928 = vmatpush.bf16.msra.mxu0 0
        %1929 = vmatpush.bf16.msra.mxu0 %v1911
        %1930 = vmatmul.bf16.gmra.mxu0 %v1908
        %v1931 = vpop.f32.mrf.mxu0
        %v1932 = vadd.f32 0.0, %v1931
        %v1933 = vpop.f32.mrf.mxu0
        %1934 = vdwg.mxu0
        %1935 = vmatpush.bf16.msra.mxu0 0
        %1936 = vmatpush.bf16.msra.mxu0 0
        %1937 = vmatpush.bf16.msra.mxu0 0
        %1938 = vmatpush.bf16.msra.mxu0 0
        %1939 = vmatpush.bf16.msra.mxu0 0
        %1940 = vmatpush.bf16.msra.mxu0 0
        %1941 = vmatpush.bf16.msra.mxu0 0
        %1942 = vmatpush.bf16.msra.mxu0 %v1914
        %1943 = vmatmul.bf16.gmra.mxu0 %v1908
        %v1944 = vpop.f32.mrf.mxu0
        %v1945 = vadd.f32 0.0, %v1944
        %v1946 = vpop.f32.mrf.mxu0
        %1947 = vdwg.mxu0
        %1948 = vmatpush.bf16.msra.mxu0 0
        %1949 = vmatpush.bf16.msra.mxu0 0
        %1950 = vmatpush.bf16.msra.mxu0 0
        %1951 = vmatpush.bf16.msra.mxu0 0
        %1952 = vmatpush.bf16.msra.mxu0 0
        %1953 = vmatpush.bf16.msra.mxu0 0
        %1954 = vmatpush.bf16.msra.mxu0 0
        %1955 = vmatpush.bf16.msra.mxu0 %v1917
        %1956 = vmatmul.bf16.gmra.mxu0 %v1908
        %v1957 = vpop.f32.mrf.mxu0
        %v1958 = vadd.f32 0.0, %v1957
        %v1959 = vpop.f32.mrf.mxu0
        %1960 = vdwg.mxu0
        %1961 = vmatpush.bf16.msra.mxu0 0
        %1962 = vmatpush.bf16.msra.mxu0 0
        %1963 = vmatpush.bf16.msra.mxu0 0
        %1964 = vmatpush.bf16.msra.mxu0 0
        %1965 = vmatpush.bf16.msra.mxu0 0
        %1966 = vmatpush.bf16.msra.mxu0 0
        %1967 = vmatpush.bf16.msra.mxu0 0
        %1968 = vmatpush.bf16.msra.mxu0 %v1920
        %1969 = vmatmul.bf16.gmra.mxu0 %v1908
        %v1970 = vpop.f32.mrf.mxu0
        %v1971 = vadd.f32 0.0, %v1970
        %v1972 = vpop.f32.mrf.mxu0
        %1973 = vdwg.mxu0
        %v1974 = vadd.f32 %v1887, %v1932
        %v1975 = vadd.f32 %v1888, %v1945
        %v1976 = vadd.f32 %v1889, %v1958
        %v1977 = vadd.f32 %v1890, %v1971
        %v1978 = vld [vmem:[%s6] sm:$0xff]
        %1980 = vset.pattern.permute.xlu0 0
        %1981 = vperm.xlu0 %1980, %v1978
        %v1982 = vpop.permute.xlu0 %1981
        %v1984 = vadd.f32 %v1974, %v1982
        %v1985 = vadd.f32 %v1975, %v1982
        %v1986 = vadd.f32 %v1976, %v1982
        %v1987 = vadd.f32 %v1977, %v1982
        %v1988 = vmul.f32 %v1984, %v1106
        %v1989 = vmul.f32 %v1985, %v1107
        %v1990 = vmul.f32 %v1986, %v1108
        %v1991 = vmul.f32 %v1987, %v1109
        %v1992 = vadd.f32 %v1988, %v1989
        %v1993 = vadd.f32 %v1992, %v1990
        %v1994 = vadd.f32 %v1993, %v1991
        %1995 = vadd.xlane.f32.xlu0 %v1994
        %v1996 = vpop.xlane.xlu0 %1995
        %v1997 = vmul.f32 %v1996, 0.00390625
        %v1998 = vmul.f32 %v1988, %v1984
        %v1999 = vmul.f32 %v1989, %v1985
        %v2000 = vmul.f32 %v1990, %v1986
        %v2001 = vmul.f32 %v1991, %v1987
        %v2002 = vadd.f32 %v1998, %v1999
        %v2003 = vadd.f32 %v2002, %v2000
        %v2004 = vadd.f32 %v2003, %v2001
        %2005 = vadd.xlane.f32.xlu0 %v2004
        %v2006 = vpop.xlane.xlu0 %2005
        %v2007 = vmul.f32 %v2006, 0.00390625
        %v2008 = vmul.f32 %v1997, %v1997
        %v2009 = vsub.f32 %v2007, %v2008
        %v2010 = vsub.f32 %v1984, %v1997
        %v2011 = vsub.f32 %v1985, %v1997
        %v2012 = vsub.f32 %v1986, %v1997
        %v2013 = vsub.f32 %v1987, %v1997
        %v2014 = vadd.f32 %v2009, 1e-05
        %v2015 = vrsqrt.pop %v2014
        %v2016 = vmul.f32 %v2015, %v2014
        %v2017 = vmul.f32 %v2016, %v2015
        %v2018 = vmul.f32 0.5, %v2017
        %v2019 = vsub.f32 1.5, %v2018
        %v2020 = vmul.f32 %v2015, %v2019
        %vm2021 = vweird.f32 %v2014
        %vm2022 = vweird.f32 %v2015
        %vm2023 = vmor %vm2021, %vm2022
        %v2024 = vsel %vm2023, %v2015, %v2020
        %v2025 = vmul.f32 %v2010, %v2024
        %v2026 = vmul.f32 %v2011, %v2024
        %v2027 = vmul.f32 %v2012, %v2024
        %v2028 = vmul.f32 %v2013, %v2024
        %vm2029 = vcmp.ge.f32.partialorder %v2025, 0.0
        %vm2030 = vcmp.ge.f32.partialorder %v2026, 0.0
        %vm2031 = vcmp.ge.f32.partialorder %v2027, 0.0
        %vm2032 = vcmp.ge.f32.partialorder %v2028, 0.0
        %v2033 = vstv %s1201
        %v2034 = vmul.f32 %v2033, %v2025
        %v2035 = vmul.f32 %v2033, %v2026
        %v2036 = vmul.f32 %v2033, %v2027
        %v2037 = vmul.f32 %v2033, %v2028
        %v2038 = vsel %vm2029, %v2025, %v2034
        %v2039 = vsel %vm2030, %v2026, %v2035
        %v2040 = vsel %vm2031, %v2027, %v2036
        %v2041 = vsel %vm2032, %v2028, %v2037
        %2042 = vst [vmem:[%s300] sm:$0xff] %v2038
        %2043 = vst [vmem:[%s300 + $0x8] sm:$0xff] %v2039
        %2044 = vst [vmem:[%s300 + $0x10] sm:$0xff] %v2040
        %2045 = vst [vmem:[%s300 + $0x18] sm:$0xff] %v2041
        %s2046 = sand.u32 %s205, 1
        %s2047 = scalar_lea.sflag [#allocation6], %s2046
        %s2048 = sand.u32 %s205, 1
        %s2049 = smul.addr %s2048, 32
        %s2050 = scalar_lea.vmem [#allocation5], %s2049
        // Predicated region
        $region53: #{tpu_custom_call.1} parent=51 // pred_check
          %p2051 = pneg %p215
        $region54: #{tpu_custom_call.1} parent=51 // pred_check_branch
          %2053 = sbr.rel (%p2051) target = $region56
        $region55: #{tpu_custom_call.1} parent=51 // pred_region
          %2055 = vsyncadd %s2047, 0
          %s2056 = smul.addr %s24, 4
          %s2057 = smul.addr %s2056, 8
          %s2058 = scalar_lea.hbm %s8, %s2057
          %s2060 = sshll.u32 %s2050, 4
          %s2061 = int_to_ptr.vmem [resolvable:$true] %s2060
          %s2062 = sshll.u32 %s2058, 4
          %s2063 = int_to_ptr.hbm [resolvable:$true] %s2062
          %2065 = dma.vmem_to_hbm [thread:$0]  %s2061, 512, %s2063, %s2047
        $region56: #{tpu_custom_call.1} parent=51 // pred_fallthru
          _
      $region52: #{tpu_custom_call.1} parent=5 // pred_fallthru
        _
      %p2066 = scmp.le.s32.totalorder 2, %s19
      // Predicated region
      $region57: #{tpu_custom_call.1} parent=5 // pred_check
        %p2067 = pneg %p2066
      $region58: #{tpu_custom_call.1} parent=5 // pred_check_branch
        %2069 = sbr.rel (%p2067) target = $region60
      $region59: #{tpu_custom_call.1} parent=5 // pred_region
        %s2070 = ssub.s32 %s19, 2
        // Predicated region
        $region61: #{tpu_custom_call.1} parent=59 // pred_check
          %p2071 = pneg %p221
        $region62: #{tpu_custom_call.1} parent=59 // pred_check_branch
          %2073 = sbr.rel (%p2071) target = $region64
        $region63: #{tpu_custom_call.1} parent=59 // pred_region
          %s2074 = sand.u32 %s206, 1
          %s2075 = scalar_lea.sflag [#allocation6], %s2074
          %s2076 = sand.u32 %s206, 1
          %s2077 = smul.addr %s2076, 32
          %s2078 = scalar_lea.vmem [#allocation5], %s2077
          %2080 = dma.done %s2075, 512
        $region64: #{tpu_custom_call.1} parent=59 // pred_fallthru
          _
      $region60: #{tpu_custom_call.1} parent=5 // pred_fallthru
        _
    $region6: #{tpu_custom_call.1} parent=1 // loop_footer
      %s23 = sadd.s32 1, %s19
    $region7: #{tpu_custom_call.1} parent=1 // loop_footer_branch
      %18 = sbr.rel target = $region3
    $region8: #{tpu_custom_call.1} parent=1 // loop_exit
      _
    %2081 = vsyncpa [#allocation6], 1
    %s2082 = scalar_lea.sflag [#allocation6], 1
    %2083 = vsyncpa %s2082, 1

</llo_original>
